<compile_context>
chip_gen: v7x
topology: tpu7x:2x2x1
jax: 0.10.0
libtpu: 0.0.40
codegen_flags: <defaults>
</compile_context>

<pallas_src>
import functools

import numpy as np
import jax
import jax.numpy as jnp
from jax.experimental import pallas as pl
from jax.experimental.pallas import tpu as pltpu


def _residual_block_kernel(xf_ref, mask_ref, w1_ref, b1_ref, w2_ref, b2_ref,
                           out_ref, *, Wp, L1, L2):
    # xf_ref   : (1, C, L0) f32  -- zero-padded canvas (2-pixel ring), flattened rows
    # mask_ref : (1, L1)    f32  -- 1 on the image interior of the conv1 domain, else 0
    # w*_ref   : (9, C, C)  bf16 -- tap-major weights, layout (tap, cout, cin)
    # b*_ref   : (C, 1)     f32
    # out_ref  : (1, C, L2)      -- L2 = H*Wp (wrapper slices off the Wp-W garbage cols)
    xf = xf_ref[0]                        # (C, L0) f32, loaded once
    xf_bf = xf.astype(jnp.bfloat16)       # MXU operand copy

    def swish(z):                         # z * sigmoid(z); reciprocal on the EUP
        return z * pl.reciprocal(1.0 + jnp.exp(-z), approx=True)

    def conv3x3(src_bf, w_ref, b_ref, n):
        # src_bf: (C, >= n + 2*Wp + 2) bf16.  Returns (C, n) f32.
        # 9 flat-shifted matmuls: (Cout, Cin) @ (Cin, n) on the MXU, f32 accumulation.
        acc = None
        for dy in range(3):
            for dx in range(3):
                off = dy * Wp + dx
                xs = src_bf[:, off:off + n]                       # lane-shifted window
                y = jnp.dot(w_ref[dy * 3 + dx], xs,
                            preferred_element_type=jnp.float32)   # (C, n)
                acc = y if acc is None else acc + y
        return acc + b_ref[...]                                    # (C,1) lane-broadcast

    # ---- conv1 + Swish over the extended flat domain, ring/garbage zeroed ----
    h1 = swish(conv3x3(xf_bf, w1_ref, b1_ref, L1)) * mask_ref[...]   # (C, L1) f32
    # ---- conv2 + Swish over the output flat domain ---------------------------
    h2 = swish(conv3x3(h1.astype(jnp.bfloat16), w2_ref, b2_ref, L2))  # (C, L2) f32
    # ---- residual add: image interior of the canvas starts at flat 2*Wp + 2 --
    res = xf[:, 2 * Wp + 2: 2 * Wp + 2 + L2]
    out_ref[0] = (res + h2).astype(out_ref.dtype)


def residual_block_pallas(x_nchw, params):
    """x_nchw: (B, C, H, W) f32.
    params: w1/w2 (9, Cout, Cin) tap-major (tap = ky*3+kx); b1/b2 (C,)."""
    B, C, H, W = x_nchw.shape
    Wp = W + 4                 # canvas width: 2-pixel zero ring on each side
    Hp = H + 5                 # 2 top + H + 3 bottom (1 slack row for flat-shift reads)
    L0 = Hp * Wp               # flattened canvas length
    L2 = H * Wp                # conv2 / output flat-domain length
    L1 = L2 + 2 * Wp + 2       # conv1 flat-domain length (covers all conv2 reads)

    # --- layout plumbing only: zero-pad and flatten rows (no transposes) ---
    xpad = jnp.pad(x_nchw, ((0, 0), (0, 0), (2, 3), (2, 2)))          # (B, C, Hp, Wp)
    xf = xpad.reshape(B, C, L0)

    # Constant interior mask over the conv1 flat domain: 1 iff the flat position
    # maps to a real image pixel (rows 1..H, cols 1..W of the conv1 domain).
    m2 = np.zeros((H + 3, Wp), dtype=np.float32)
    m2[1:H + 1, 1:W + 1] = 1.0
    mask = jnp.asarray(m2.reshape(-1)[:L1].reshape(1, L1))

    w1 = params["w1"].astype(jnp.bfloat16)
    w2 = params["w2"].astype(jnp.bfloat16)
    b1 = params["b1"].reshape(C, 1).astype(jnp.float32)
    b2 = params["b2"].reshape(C, 1).astype(jnp.float32)

    kernel = functools.partial(_residual_block_kernel, Wp=Wp, L1=L1, L2=L2)
    out_flat = pl.pallas_call(
        kernel,
        out_shape=jax.ShapeDtypeStruct((B, C, L2), x_nchw.dtype),
        grid_spec=pltpu.PrefetchScalarGridSpec(
            num_scalar_prefetch=0,
            grid=(B,),
            in_specs=[
                pl.BlockSpec((1, C, L0), lambda b: (b, 0, 0)),   # xf
                pl.BlockSpec((1, L1), lambda b: (0, 0)),         # mask
                pl.BlockSpec((9, C, C), lambda b: (0, 0, 0)),    # w1
                pl.BlockSpec((C, 1), lambda b: (0, 0)),          # b1
                pl.BlockSpec((9, C, C), lambda b: (0, 0, 0)),    # w2
                pl.BlockSpec((C, 1), lambda b: (0, 0)),          # b2
            ],
            out_specs=pl.BlockSpec((1, C, L2), lambda b: (b, 0, 0)),
        ),
        compiler_params=pltpu.CompilerParams(
            dimension_semantics=("parallel",)),
    )(xf, mask, w1, b1, w2, b2)

    # Drop the Wp-W garbage columns per row; pure slice, no transpose.
    return out_flat.reshape(B, C, H, Wp)[:, :, :, :W]


# ---------------------- pure-JAX reference (PyTorch semantics) ----------------
def residual_block_ref(x, params):
    C = x.shape[1]

    def conv_swish(inp, w9, b):
        # w9: (9, cout, cin) tap-major  ->  OIHW
        w_oihw = jnp.transpose(w9.reshape(3, 3, C, C), (2, 3, 0, 1))
        y = jax.lax.conv_general_dilated(
            inp, w_oihw, window_strides=(1, 1), padding=((1, 1), (1, 1)),
            dimension_numbers=("NCHW", "OIHW", "NCHW"),
            precision=jax.lax.Precision.HIGHEST)
        y = y + b.reshape(1, -1, 1, 1)
        return y * jax.nn.sigmoid(y)

    return x + conv_swish(conv_swish(x, params["w1"], params["b1"]),
                          params["w2"], params["b2"])


if __name__ == "__main__":
    B, C, H, W = 2, 4, 16, 16

    key = jax.random.PRNGKey(0)
    kx, k1, k2, k3, k4 = jax.random.split(key, 5)

    x = jax.random.normal(kx, (B, C, H, W), dtype=jnp.float32)

    scale = 1.0 / np.sqrt(9 * C)
    params = {
        # non-zero weights so the full conv/activation path is validated
        "w1": jax.random.normal(k1, (9, C, C), jnp.float32) * scale,
        "b1": jax.random.normal(k2, (C,), jnp.float32) * 0.1,
        "w2": jax.random.normal(k3, (9, C, C), jnp.float32) * scale,
        "b2": jax.random.normal(k4, (C,), jnp.float32) * 0.1,
    }

    out = jax.block_until_ready(residual_block_pallas(x, params))
    ref = jax.block_until_ready(residual_block_ref(x, params))

    assert out.shape == (B, C, H, W)
    # bf16 matmul operands + approx reciprocal in-kernel vs f32 reference
    np.testing.assert_allclose(np.asarray(out), np.asarray(ref),
                               rtol=3e-2, atol=3e-2)
    print("KERNEL_OK")
</pallas_src>

<mosaic_0001>
module attributes {stable_mosaic.version = 11 : i64} {
  func.func @_residual_block_kernel(%arg0: i32, %arg1: memref<1x4x420xf32, #tpu.memory_space<vmem>>, %arg2: memref<1x362xf32, #tpu.memory_space<vmem>>, %arg3: memref<9x4x4xbf16, #tpu.memory_space<vmem>>, %arg4: memref<4x1xf32, #tpu.memory_space<vmem>>, %arg5: memref<9x4x4xbf16, #tpu.memory_space<vmem>>, %arg6: memref<4x1xf32, #tpu.memory_space<vmem>>, %arg7: memref<1x4x320xf32, #tpu.memory_space<vmem>>) attributes {dimension_semantics = [#tpu.dimension_semantics<parallel>], iteration_bounds = array<i64: 2>, scalar_prefetch = 0 : i64, scratch_operands = 0 : i64, tpu.core_type = #tpu.core_type<tc>, window_params = [{transform_indices = @transform_0, window_bounds = array<i64: 1, 4, 420>}, {pipeline_mode = #tpu.pipeline_mode<synchronous>, transform_indices = @transform_1, window_bounds = array<i64: 1, 362>}, {pipeline_mode = #tpu.pipeline_mode<synchronous>, transform_indices = @transform_2, window_bounds = array<i64: 9, 4, 4>}, {pipeline_mode = #tpu.pipeline_mode<synchronous>, transform_indices = @transform_3, window_bounds = array<i64: 4, 1>}, {pipeline_mode = #tpu.pipeline_mode<synchronous>, transform_indices = @transform_4, window_bounds = array<i64: 9, 4, 4>}, {pipeline_mode = #tpu.pipeline_mode<synchronous>, transform_indices = @transform_5, window_bounds = array<i64: 4, 1>}, {transform_indices = @transform_6, window_bounds = array<i64: 1, 4, 320>}]} {
    %c0 = arith.constant 0 : index
    %c0_0 = arith.constant 0 : index
    %c0_1 = arith.constant 0 : index
    %0 = vector.load %arg1[%c0, %c0_0, %c0_1] : memref<1x4x420xf32, #tpu.memory_space<vmem>>, vector<1x4x420xf32>
    %1 = vector.shape_cast %0 : vector<1x4x420xf32> to vector<4x420xf32>
    %2 = arith.truncf %1 : vector<4x420xf32> to vector<4x420xbf16>
    %3 = vector.extract_strided_slice %2 {offsets = [0, 0], sizes = [4, 362], strides = [1, 1]} : vector<4x420xbf16> to vector<4x362xbf16>
    %c0_2 = arith.constant 0 : index
    %c0_3 = arith.constant 0 : index
    %c0_4 = arith.constant 0 : index
    %4 = vector.load %arg3[%c0_2, %c0_3, %c0_4] : memref<9x4x4xbf16, #tpu.memory_space<vmem>>, vector<1x4x4xbf16>
    %5 = vector.shape_cast %4 : vector<1x4x4xbf16> to vector<4x4xbf16>
    %cst = arith.constant dense<0.000000e+00> : vector<4x362xf32>
    %6 = tpu.matmul %5, %3, %cst {dimension_numbers = #tpu.dot_dimension_numbers<[1], [0], [0], [1], [0, 0, 1, 1], [], []>} : vector<4x4xbf16>, vector<4x362xbf16>, vector<4x362xf32> -> vector<4x362xf32>
    %7 = vector.extract_strided_slice %2 {offsets = [0, 1], sizes = [4, 362], strides = [1, 1]} : vector<4x420xbf16> to vector<4x362xbf16>
    %c1 = arith.constant 1 : index
    %c0_5 = arith.constant 0 : index
    %c0_6 = arith.constant 0 : index
    %8 = vector.load %arg3[%c1, %c0_5, %c0_6] : memref<9x4x4xbf16, #tpu.memory_space<vmem>>, vector<1x4x4xbf16>
    %9 = vector.shape_cast %8 : vector<1x4x4xbf16> to vector<4x4xbf16>
    %cst_7 = arith.constant dense<0.000000e+00> : vector<4x362xf32>
    %10 = tpu.matmul %9, %7, %cst_7 {dimension_numbers = #tpu.dot_dimension_numbers<[1], [0], [0], [1], [0, 0, 1, 1], [], []>} : vector<4x4xbf16>, vector<4x362xbf16>, vector<4x362xf32> -> vector<4x362xf32>
    %11 = arith.addf %6, %10 : vector<4x362xf32>
    %12 = vector.extract_strided_slice %2 {offsets = [0, 2], sizes = [4, 362], strides = [1, 1]} : vector<4x420xbf16> to vector<4x362xbf16>
    %c2 = arith.constant 2 : index
    %c0_8 = arith.constant 0 : index
    %c0_9 = arith.constant 0 : index
    %13 = vector.load %arg3[%c2, %c0_8, %c0_9] : memref<9x4x4xbf16, #tpu.memory_space<vmem>>, vector<1x4x4xbf16>
    %14 = vector.shape_cast %13 : vector<1x4x4xbf16> to vector<4x4xbf16>
    %cst_10 = arith.constant dense<0.000000e+00> : vector<4x362xf32>
    %15 = tpu.matmul %14, %12, %cst_10 {dimension_numbers = #tpu.dot_dimension_numbers<[1], [0], [0], [1], [0, 0, 1, 1], [], []>} : vector<4x4xbf16>, vector<4x362xbf16>, vector<4x362xf32> -> vector<4x362xf32>
    %16 = arith.addf %11, %15 : vector<4x362xf32>
    %17 = vector.extract_strided_slice %2 {offsets = [0, 20], sizes = [4, 362], strides = [1, 1]} : vector<4x420xbf16> to vector<4x362xbf16>
    %c3 = arith.constant 3 : index
    %c0_11 = arith.constant 0 : index
    %c0_12 = arith.constant 0 : index
    %18 = vector.load %arg3[%c3, %c0_11, %c0_12] : memref<9x4x4xbf16, #tpu.memory_space<vmem>>, vector<1x4x4xbf16>
    %19 = vector.shape_cast %18 : vector<1x4x4xbf16> to vector<4x4xbf16>
    %cst_13 = arith.constant dense<0.000000e+00> : vector<4x362xf32>
    %20 = tpu.matmul %19, %17, %cst_13 {dimension_numbers = #tpu.dot_dimension_numbers<[1], [0], [0], [1], [0, 0, 1, 1], [], []>} : vector<4x4xbf16>, vector<4x362xbf16>, vector<4x362xf32> -> vector<4x362xf32>
    %21 = arith.addf %16, %20 : vector<4x362xf32>
    %22 = vector.extract_strided_slice %2 {offsets = [0, 21], sizes = [4, 362], strides = [1, 1]} : vector<4x420xbf16> to vector<4x362xbf16>
    %c4 = arith.constant 4 : index
    %c0_14 = arith.constant 0 : index
    %c0_15 = arith.constant 0 : index
    %23 = vector.load %arg3[%c4, %c0_14, %c0_15] : memref<9x4x4xbf16, #tpu.memory_space<vmem>>, vector<1x4x4xbf16>
    %24 = vector.shape_cast %23 : vector<1x4x4xbf16> to vector<4x4xbf16>
    %cst_16 = arith.constant dense<0.000000e+00> : vector<4x362xf32>
    %25 = tpu.matmul %24, %22, %cst_16 {dimension_numbers = #tpu.dot_dimension_numbers<[1], [0], [0], [1], [0, 0, 1, 1], [], []>} : vector<4x4xbf16>, vector<4x362xbf16>, vector<4x362xf32> -> vector<4x362xf32>
    %26 = arith.addf %21, %25 : vector<4x362xf32>
    %27 = vector.extract_strided_slice %2 {offsets = [0, 22], sizes = [4, 362], strides = [1, 1]} : vector<4x420xbf16> to vector<4x362xbf16>
    %c5 = arith.constant 5 : index
    %c0_17 = arith.constant 0 : index
    %c0_18 = arith.constant 0 : index
    %28 = vector.load %arg3[%c5, %c0_17, %c0_18] : memref<9x4x4xbf16, #tpu.memory_space<vmem>>, vector<1x4x4xbf16>
    %29 = vector.shape_cast %28 : vector<1x4x4xbf16> to vector<4x4xbf16>
    %cst_19 = arith.constant dense<0.000000e+00> : vector<4x362xf32>
    %30 = tpu.matmul %29, %27, %cst_19 {dimension_numbers = #tpu.dot_dimension_numbers<[1], [0], [0], [1], [0, 0, 1, 1], [], []>} : vector<4x4xbf16>, vector<4x362xbf16>, vector<4x362xf32> -> vector<4x362xf32>
    %31 = arith.addf %26, %30 : vector<4x362xf32>
    %32 = vector.extract_strided_slice %2 {offsets = [0, 40], sizes = [4, 362], strides = [1, 1]} : vector<4x420xbf16> to vector<4x362xbf16>
    %c6 = arith.constant 6 : index
    %c0_20 = arith.constant 0 : index
    %c0_21 = arith.constant 0 : index
    %33 = vector.load %arg3[%c6, %c0_20, %c0_21] : memref<9x4x4xbf16, #tpu.memory_space<vmem>>, vector<1x4x4xbf16>
    %34 = vector.shape_cast %33 : vector<1x4x4xbf16> to vector<4x4xbf16>
    %cst_22 = arith.constant dense<0.000000e+00> : vector<4x362xf32>
    %35 = tpu.matmul %34, %32, %cst_22 {dimension_numbers = #tpu.dot_dimension_numbers<[1], [0], [0], [1], [0, 0, 1, 1], [], []>} : vector<4x4xbf16>, vector<4x362xbf16>, vector<4x362xf32> -> vector<4x362xf32>
    %36 = arith.addf %31, %35 : vector<4x362xf32>
    %37 = vector.extract_strided_slice %2 {offsets = [0, 41], sizes = [4, 362], strides = [1, 1]} : vector<4x420xbf16> to vector<4x362xbf16>
    %c7 = arith.constant 7 : index
    %c0_23 = arith.constant 0 : index
    %c0_24 = arith.constant 0 : index
    %38 = vector.load %arg3[%c7, %c0_23, %c0_24] : memref<9x4x4xbf16, #tpu.memory_space<vmem>>, vector<1x4x4xbf16>
    %39 = vector.shape_cast %38 : vector<1x4x4xbf16> to vector<4x4xbf16>
    %cst_25 = arith.constant dense<0.000000e+00> : vector<4x362xf32>
    %40 = tpu.matmul %39, %37, %cst_25 {dimension_numbers = #tpu.dot_dimension_numbers<[1], [0], [0], [1], [0, 0, 1, 1], [], []>} : vector<4x4xbf16>, vector<4x362xbf16>, vector<4x362xf32> -> vector<4x362xf32>
    %41 = arith.addf %36, %40 : vector<4x362xf32>
    %42 = vector.extract_strided_slice %2 {offsets = [0, 42], sizes = [4, 362], strides = [1, 1]} : vector<4x420xbf16> to vector<4x362xbf16>
    %c8 = arith.constant 8 : index
    %c0_26 = arith.constant 0 : index
    %c0_27 = arith.constant 0 : index
    %43 = vector.load %arg3[%c8, %c0_26, %c0_27] : memref<9x4x4xbf16, #tpu.memory_space<vmem>>, vector<1x4x4xbf16>
    %44 = vector.shape_cast %43 : vector<1x4x4xbf16> to vector<4x4xbf16>
    %cst_28 = arith.constant dense<0.000000e+00> : vector<4x362xf32>
    %45 = tpu.matmul %44, %42, %cst_28 {dimension_numbers = #tpu.dot_dimension_numbers<[1], [0], [0], [1], [0, 0, 1, 1], [], []>} : vector<4x4xbf16>, vector<4x362xbf16>, vector<4x362xf32> -> vector<4x362xf32>
    %46 = arith.addf %41, %45 : vector<4x362xf32>
    %c0_29 = arith.constant 0 : index
    %c0_30 = arith.constant 0 : index
    %47 = vector.load %arg4[%c0_29, %c0_30] : memref<4x1xf32, #tpu.memory_space<vmem>>, vector<4x1xf32>
    %48 = vector.broadcast %47 : vector<4x1xf32> to vector<4x362xf32>
    %49 = arith.addf %46, %48 : vector<4x362xf32>
    %cst_31 = arith.constant 0.000000e+00 : f32
    %50 = vector.broadcast %cst_31 : f32 to vector<4x362xf32>
    %51 = arith.subf %50, %49 : vector<4x362xf32>
    %52 = math.exp %51 : vector<4x362xf32>
    %cst_32 = arith.constant 1.000000e+00 : f32
    %53 = vector.broadcast %cst_32 : f32 to vector<4x362xf32>
    %54 = arith.addf %53, %52 : vector<4x362xf32>
    %55 = tpu.reciprocal %54 {approx = true} : vector<4x362xf32> -> vector<4x362xf32>
    %56 = arith.mulf %49, %55 : vector<4x362xf32>
    %c0_33 = arith.constant 0 : index
    %c0_34 = arith.constant 0 : index
    %57 = vector.load %arg2[%c0_33, %c0_34] : memref<1x362xf32, #tpu.memory_space<vmem>>, vector<1x362xf32>
    %58 = vector.broadcast %57 : vector<1x362xf32> to vector<4x362xf32>
    %59 = arith.mulf %56, %58 : vector<4x362xf32>
    %60 = arith.truncf %59 : vector<4x362xf32> to vector<4x362xbf16>
    %61 = vector.extract_strided_slice %60 {offsets = [0, 0], sizes = [4, 320], strides = [1, 1]} : vector<4x362xbf16> to vector<4x320xbf16>
    %c0_35 = arith.constant 0 : index
    %c0_36 = arith.constant 0 : index
    %c0_37 = arith.constant 0 : index
    %62 = vector.load %arg5[%c0_35, %c0_36, %c0_37] : memref<9x4x4xbf16, #tpu.memory_space<vmem>>, vector<1x4x4xbf16>
    %63 = vector.shape_cast %62 : vector<1x4x4xbf16> to vector<4x4xbf16>
    %cst_38 = arith.constant dense<0.000000e+00> : vector<4x320xf32>
    %64 = tpu.matmul %63, %61, %cst_38 {dimension_numbers = #tpu.dot_dimension_numbers<[1], [0], [0], [1], [0, 0, 1, 1], [], []>} : vector<4x4xbf16>, vector<4x320xbf16>, vector<4x320xf32> -> vector<4x320xf32>
    %65 = vector.extract_strided_slice %60 {offsets = [0, 1], sizes = [4, 320], strides = [1, 1]} : vector<4x362xbf16> to vector<4x320xbf16>
    %c1_39 = arith.constant 1 : index
    %c0_40 = arith.constant 0 : index
    %c0_41 = arith.constant 0 : index
    %66 = vector.load %arg5[%c1_39, %c0_40, %c0_41] : memref<9x4x4xbf16, #tpu.memory_space<vmem>>, vector<1x4x4xbf16>
    %67 = vector.shape_cast %66 : vector<1x4x4xbf16> to vector<4x4xbf16>
    %cst_42 = arith.constant dense<0.000000e+00> : vector<4x320xf32>
    %68 = tpu.matmul %67, %65, %cst_42 {dimension_numbers = #tpu.dot_dimension_numbers<[1], [0], [0], [1], [0, 0, 1, 1], [], []>} : vector<4x4xbf16>, vector<4x320xbf16>, vector<4x320xf32> -> vector<4x320xf32>
    %69 = arith.addf %64, %68 : vector<4x320xf32>
    %70 = vector.extract_strided_slice %60 {offsets = [0, 2], sizes = [4, 320], strides = [1, 1]} : vector<4x362xbf16> to vector<4x320xbf16>
    %c2_43 = arith.constant 2 : index
    %c0_44 = arith.constant 0 : index
    %c0_45 = arith.constant 0 : index
    %71 = vector.load %arg5[%c2_43, %c0_44, %c0_45] : memref<9x4x4xbf16, #tpu.memory_space<vmem>>, vector<1x4x4xbf16>
    %72 = vector.shape_cast %71 : vector<1x4x4xbf16> to vector<4x4xbf16>
    %cst_46 = arith.constant dense<0.000000e+00> : vector<4x320xf32>
    %73 = tpu.matmul %72, %70, %cst_46 {dimension_numbers = #tpu.dot_dimension_numbers<[1], [0], [0], [1], [0, 0, 1, 1], [], []>} : vector<4x4xbf16>, vector<4x320xbf16>, vector<4x320xf32> -> vector<4x320xf32>
    %74 = arith.addf %69, %73 : vector<4x320xf32>
    %75 = vector.extract_strided_slice %60 {offsets = [0, 20], sizes = [4, 320], strides = [1, 1]} : vector<4x362xbf16> to vector<4x320xbf16>
    %c3_47 = arith.constant 3 : index
    %c0_48 = arith.constant 0 : index
    %c0_49 = arith.constant 0 : index
    %76 = vector.load %arg5[%c3_47, %c0_48, %c0_49] : memref<9x4x4xbf16, #tpu.memory_space<vmem>>, vector<1x4x4xbf16>
    %77 = vector.shape_cast %76 : vector<1x4x4xbf16> to vector<4x4xbf16>
    %cst_50 = arith.constant dense<0.000000e+00> : vector<4x320xf32>
    %78 = tpu.matmul %77, %75, %cst_50 {dimension_numbers = #tpu.dot_dimension_numbers<[1], [0], [0], [1], [0, 0, 1, 1], [], []>} : vector<4x4xbf16>, vector<4x320xbf16>, vector<4x320xf32> -> vector<4x320xf32>
    %79 = arith.addf %74, %78 : vector<4x320xf32>
    %80 = vector.extract_strided_slice %60 {offsets = [0, 21], sizes = [4, 320], strides = [1, 1]} : vector<4x362xbf16> to vector<4x320xbf16>
    %c4_51 = arith.constant 4 : index
    %c0_52 = arith.constant 0 : index
    %c0_53 = arith.constant 0 : index
    %81 = vector.load %arg5[%c4_51, %c0_52, %c0_53] : memref<9x4x4xbf16, #tpu.memory_space<vmem>>, vector<1x4x4xbf16>
    %82 = vector.shape_cast %81 : vector<1x4x4xbf16> to vector<4x4xbf16>
    %cst_54 = arith.constant dense<0.000000e+00> : vector<4x320xf32>
    %83 = tpu.matmul %82, %80, %cst_54 {dimension_numbers = #tpu.dot_dimension_numbers<[1], [0], [0], [1], [0, 0, 1, 1], [], []>} : vector<4x4xbf16>, vector<4x320xbf16>, vector<4x320xf32> -> vector<4x320xf32>
    %84 = arith.addf %79, %83 : vector<4x320xf32>
    %85 = vector.extract_strided_slice %60 {offsets = [0, 22], sizes = [4, 320], strides = [1, 1]} : vector<4x362xbf16> to vector<4x320xbf16>
    %c5_55 = arith.constant 5 : index
    %c0_56 = arith.constant 0 : index
    %c0_57 = arith.constant 0 : index
    %86 = vector.load %arg5[%c5_55, %c0_56, %c0_57] : memref<9x4x4xbf16, #tpu.memory_space<vmem>>, vector<1x4x4xbf16>
    %87 = vector.shape_cast %86 : vector<1x4x4xbf16> to vector<4x4xbf16>
    %cst_58 = arith.constant dense<0.000000e+00> : vector<4x320xf32>
    %88 = tpu.matmul %87, %85, %cst_58 {dimension_numbers = #tpu.dot_dimension_numbers<[1], [0], [0], [1], [0, 0, 1, 1], [], []>} : vector<4x4xbf16>, vector<4x320xbf16>, vector<4x320xf32> -> vector<4x320xf32>
    %89 = arith.addf %84, %88 : vector<4x320xf32>
    %90 = vector.extract_strided_slice %60 {offsets = [0, 40], sizes = [4, 320], strides = [1, 1]} : vector<4x362xbf16> to vector<4x320xbf16>
    %c6_59 = arith.constant 6 : index
    %c0_60 = arith.constant 0 : index
    %c0_61 = arith.constant 0 : index
    %91 = vector.load %arg5[%c6_59, %c0_60, %c0_61] : memref<9x4x4xbf16, #tpu.memory_space<vmem>>, vector<1x4x4xbf16>
    %92 = vector.shape_cast %91 : vector<1x4x4xbf16> to vector<4x4xbf16>
    %cst_62 = arith.constant dense<0.000000e+00> : vector<4x320xf32>
    %93 = tpu.matmul %92, %90, %cst_62 {dimension_numbers = #tpu.dot_dimension_numbers<[1], [0], [0], [1], [0, 0, 1, 1], [], []>} : vector<4x4xbf16>, vector<4x320xbf16>, vector<4x320xf32> -> vector<4x320xf32>
    %94 = arith.addf %89, %93 : vector<4x320xf32>
    %95 = vector.extract_strided_slice %60 {offsets = [0, 41], sizes = [4, 320], strides = [1, 1]} : vector<4x362xbf16> to vector<4x320xbf16>
    %c7_63 = arith.constant 7 : index
    %c0_64 = arith.constant 0 : index
    %c0_65 = arith.constant 0 : index
    %96 = vector.load %arg5[%c7_63, %c0_64, %c0_65] : memref<9x4x4xbf16, #tpu.memory_space<vmem>>, vector<1x4x4xbf16>
    %97 = vector.shape_cast %96 : vector<1x4x4xbf16> to vector<4x4xbf16>
    %cst_66 = arith.constant dense<0.000000e+00> : vector<4x320xf32>
    %98 = tpu.matmul %97, %95, %cst_66 {dimension_numbers = #tpu.dot_dimension_numbers<[1], [0], [0], [1], [0, 0, 1, 1], [], []>} : vector<4x4xbf16>, vector<4x320xbf16>, vector<4x320xf32> -> vector<4x320xf32>
    %99 = arith.addf %94, %98 : vector<4x320xf32>
    %100 = vector.extract_strided_slice %60 {offsets = [0, 42], sizes = [4, 320], strides = [1, 1]} : vector<4x362xbf16> to vector<4x320xbf16>
    %c8_67 = arith.constant 8 : index
    %c0_68 = arith.constant 0 : index
    %c0_69 = arith.constant 0 : index
    %101 = vector.load %arg5[%c8_67, %c0_68, %c0_69] : memref<9x4x4xbf16, #tpu.memory_space<vmem>>, vector<1x4x4xbf16>
    %102 = vector.shape_cast %101 : vector<1x4x4xbf16> to vector<4x4xbf16>
    %cst_70 = arith.constant dense<0.000000e+00> : vector<4x320xf32>
    %103 = tpu.matmul %102, %100, %cst_70 {dimension_numbers = #tpu.dot_dimension_numbers<[1], [0], [0], [1], [0, 0, 1, 1], [], []>} : vector<4x4xbf16>, vector<4x320xbf16>, vector<4x320xf32> -> vector<4x320xf32>
    %104 = arith.addf %99, %103 : vector<4x320xf32>
    %c0_71 = arith.constant 0 : index
    %c0_72 = arith.constant 0 : index
    %105 = vector.load %arg6[%c0_71, %c0_72] : memref<4x1xf32, #tpu.memory_space<vmem>>, vector<4x1xf32>
    %106 = vector.broadcast %105 : vector<4x1xf32> to vector<4x320xf32>
    %107 = arith.addf %104, %106 : vector<4x320xf32>
    %cst_73 = arith.constant 0.000000e+00 : f32
    %108 = vector.broadcast %cst_73 : f32 to vector<4x320xf32>
    %109 = arith.subf %108, %107 : vector<4x320xf32>
    %110 = math.exp %109 : vector<4x320xf32>
    %cst_74 = arith.constant 1.000000e+00 : f32
    %111 = vector.broadcast %cst_74 : f32 to vector<4x320xf32>
    %112 = arith.addf %111, %110 : vector<4x320xf32>
    %113 = tpu.reciprocal %112 {approx = true} : vector<4x320xf32> -> vector<4x320xf32>
    %114 = arith.mulf %107, %113 : vector<4x320xf32>
    %115 = vector.extract_strided_slice %1 {offsets = [0, 42], sizes = [4, 320], strides = [1, 1]} : vector<4x420xf32> to vector<4x320xf32>
    %116 = arith.addf %115, %114 : vector<4x320xf32>
    %c0_75 = arith.constant 0 : index
    %c0_76 = arith.constant 0 : index
    %c0_77 = arith.constant 0 : index
    %117 = vector.load %arg7[%c0_75, %c0_76, %c0_77] : memref<1x4x320xf32, #tpu.memory_space<vmem>>, vector<1x4x320xf32>
    %118 = vector.shape_cast %117 : vector<1x4x320xf32> to vector<4x320xf32>
    %119 = vector.shape_cast %116 : vector<4x320xf32> to vector<1x4x320xf32>
    tpu.vector_store %arg7[%c0_75, %c0_76, %c0_77], %119 {strides = array<i32>} : memref<1x4x320xf32, #tpu.memory_space<vmem>>, vector<1x4x320xf32>,
    return
  }
  func.func @transform_0(%arg0: i32) -> (i32, i32, i32) {
    %c0_i32 = arith.constant 0 : i32
    %c0_i32_0 = arith.constant 0 : i32
    %c0_i32_1 = arith.constant 0 : i32
    return %arg0, %c0_i32, %c0_i32_0 : i32, i32, i32
  }
  func.func @transform_1(%arg0: i32) -> (i32, i32) {
    %c0_i32 = arith.constant 0 : i32
    %c0_i32_0 = arith.constant 0 : i32
    %c0_i32_1 = arith.constant 0 : i32
    return %c0_i32, %c0_i32_0 : i32, i32
  }
  func.func @transform_2(%arg0: i32) -> (i32, i32, i32) {
    %c0_i32 = arith.constant 0 : i32
    %c0_i32_0 = arith.constant 0 : i32
    %c0_i32_1 = arith.constant 0 : i32
    %c0_i32_2 = arith.constant 0 : i32
    return %c0_i32, %c0_i32_0, %c0_i32_1 : i32, i32, i32
  }
  func.func @transform_3(%arg0: i32) -> (i32, i32) {
    %c0_i32 = arith.constant 0 : i32
    %c0_i32_0 = arith.constant 0 : i32
    %c0_i32_1 = arith.constant 0 : i32
    return %c0_i32, %c0_i32_0 : i32, i32
  }
  func.func @transform_4(%arg0: i32) -> (i32, i32, i32) {
    %c0_i32 = arith.constant 0 : i32
    %c0_i32_0 = arith.constant 0 : i32
    %c0_i32_1 = arith.constant 0 : i32
    %c0_i32_2 = arith.constant 0 : i32
    return %c0_i32, %c0_i32_0, %c0_i32_1 : i32, i32, i32
  }
  func.func @transform_5(%arg0: i32) -> (i32, i32) {
    %c0_i32 = arith.constant 0 : i32
    %c0_i32_0 = arith.constant 0 : i32
    %c0_i32_1 = arith.constant 0 : i32
    return %c0_i32, %c0_i32_0 : i32, i32
  }
  func.func @transform_6(%arg0: i32) -> (i32, i32, i32) {
    %c0_i32 = arith.constant 0 : i32
    %c0_i32_0 = arith.constant 0 : i32
    %c0_i32_1 = arith.constant 0 : i32
    return %arg0, %c0_i32, %c0_i32_0 : i32, i32, i32
  }
}

</mosaic_0001>

<llo_original>
// kernel: tpu_custom_call.1
$region0: #{tpu_custom_call.1}
  #allocation0 [shape = 'u32[]', space=smem, size = 0x4, offset = 0x4, fixed_abs, tag = 'smem constant byte address 0x4 - core index']
  #allocation1 [shape = 'u32[144,128]{1,0:T(1,128)}', space=vmem, size = 0x12000, scoped, tag = 'internal scratch']
  %s0 = inlined_call_operand.vmem [shape: f32[2,4,420], index: 0, kind: input, shape index: {}]
  %s1 = inlined_call_operand.vmem [shape: f32[1,362], index: 1, kind: input, shape index: {}]
  %s2 = inlined_call_operand.vmem [shape: bf16[9,4,4], index: 2, kind: input, shape index: {}]
  %s3 = inlined_call_operand.vmem [shape: f32[4,1], index: 3, kind: input, shape index: {}]
  %s4 = inlined_call_operand.vmem [shape: bf16[9,4,4], index: 4, kind: input, shape index: {}]
  %s5 = inlined_call_operand.vmem [shape: f32[4,1], index: 5, kind: input, shape index: {}]
  %s6 = inlined_call_operand.hbm [shape: f32[2,4,320], index: 6, kind: output, shape index: {}]
  %s7 = sld [smem:[#allocation0]]
  $region57: #{tpu_custom_call.1} parent=0
    _
  %s9 = ssub.s32 1, %s7
  %s10 = scalar_select 0, %s9, %s7
  $region1: #{tpu_custom_call.1} parent=0
    #allocation2 [shape = 'u8[12288]{0}', space=vmem, size = 0x3000, scoped, tag = 'output window, operand 0']
    #allocation3 [shape = 's32[2]{0}', space=sflag, size = 0x8, scoped, tag = 'scoped memory for tpu_custom_call.1']
    %11 = vsyncpa [#allocation3], 0
    %s12 = scalar_lea.sflag [#allocation3], 1
    %13 = vsyncpa %s12, 0
    loop: start=0, step=1, limit=4
    $region2: #{tpu_custom_call.1} parent=1 // loop_pre_header
      _
    $region3: #{tpu_custom_call.1} parent=1 // loop_header
      %s15 = sphi 0, %s19
      %p16 = scmp.ge.s32.totalorder %s15, 4
      %s25 = sphi 0, %s27
      %s28 = sphi 0, %s25
      %s29 = sphi 0, %s28
      %s45 = sphi 0, %s29
      %s49 = sphi 0, %s49
      %s51 = sphi 0, %s49
      %s52 = sphi 0, %s51
      %s66 = sphi 0, %s52
      %s70 = sphi 0, %s70
      %s72 = sphi 0, %s70
      %s73 = sphi 0, %s72
      %s87 = sphi 0, %s73
      %s91 = sphi 0, %s91
      %s93 = sphi 0, %s91
      %s94 = sphi 0, %s93
      %s108 = sphi 0, %s94
      %s112 = sphi 0, %s112
      %s114 = sphi 0, %s112
      %s115 = sphi 0, %s114
      %s129 = sphi 0, %s115
      %s133 = sphi 0, %s133
      %s135 = sphi 0, %s133
      %s136 = sphi 0, %s135
      %s150 = sphi 0, %s136
      %s156 = sphi 0, %s158
      %s159 = sphi 0, %s156
      %s160 = sphi 0, %s159
      %s176 = sphi 0, %s160
    $region4: #{tpu_custom_call.1} parent=1 // loop_header_branch
      %18 = sbr.rel (%p16) target = $region8
    $region5: #{tpu_custom_call.1} parent=1 // loop_body
      %s20 = ssub.s32 %s15, 1
      %s21 = ssub.s32 %s15, 2
      %s22 = sadd.s32 %s15, 1
      %s23 = ssub.s32 %s15, %s22
      %p24 = scmp.eq.s32.totalorder %s23, 0
      %s26 = sadd.s32 %s25, 1
      %s27 = scalar_select %p24, %s25, %s26
      %p30 = pneg %p24
      %p31 = scmp.eq.s32.totalorder %s15, 1
      %p32 = por %p30, %p31
      %p33 = scmp.ne.s32.totalorder %s25, %s28
      %p34 = scmp.eq.s32.totalorder %s15, 0
      %p35 = por %p33, %p34
      %p36 = scmp.ne.s32.totalorder %s25, %s28
      %p37 = scmp.eq.s32.totalorder %s20, 1
      %p38 = por %p36, %p37
      %p39 = scmp.ne.s32.totalorder %s28, %s29
      %p40 = scmp.eq.s32.totalorder %s20, 0
      %p41 = por %p39, %p40
      %p42 = scmp.ne.s32.totalorder %s28, %s29
      %p43 = scmp.eq.s32.totalorder %s21, 1
      %p44 = por %p42, %p43
      %p46 = scmp.ne.s32.totalorder %s29, %s45
      %p47 = scmp.eq.s32.totalorder %s21, 0
      %p48 = por %p46, %p47
      %s50 = sadd.s32 %s49, 1
      %p53 = scmp.eq.s32.totalorder %s15, 1
      %p54 = scmp.ne.s32.totalorder %s49, %s51
      %p55 = scmp.eq.s32.totalorder %s15, 0
      %p56 = por %p54, %p55
      %p57 = scmp.ne.s32.totalorder %s49, %s51
      %p58 = scmp.eq.s32.totalorder %s20, 1
      %p59 = por %p57, %p58
      %p60 = scmp.ne.s32.totalorder %s51, %s52
      %p61 = scmp.eq.s32.totalorder %s20, 0
      %p62 = por %p60, %p61
      %p63 = scmp.ne.s32.totalorder %s51, %s52
      %p64 = scmp.eq.s32.totalorder %s21, 1
      %p65 = por %p63, %p64
      %p67 = scmp.ne.s32.totalorder %s52, %s66
      %p68 = scmp.eq.s32.totalorder %s21, 0
      %p69 = por %p67, %p68
      %s71 = sadd.s32 %s70, 1
      %p74 = scmp.eq.s32.totalorder %s15, 1
      %p75 = scmp.ne.s32.totalorder %s70, %s72
      %p76 = scmp.eq.s32.totalorder %s15, 0
      %p77 = por %p75, %p76
      %p78 = scmp.ne.s32.totalorder %s70, %s72
      %p79 = scmp.eq.s32.totalorder %s20, 1
      %p80 = por %p78, %p79
      %p81 = scmp.ne.s32.totalorder %s72, %s73
      %p82 = scmp.eq.s32.totalorder %s20, 0
      %p83 = por %p81, %p82
      %p84 = scmp.ne.s32.totalorder %s72, %s73
      %p85 = scmp.eq.s32.totalorder %s21, 1
      %p86 = por %p84, %p85
      %p88 = scmp.ne.s32.totalorder %s73, %s87
      %p89 = scmp.eq.s32.totalorder %s21, 0
      %p90 = por %p88, %p89
      %s92 = sadd.s32 %s91, 1
      %p95 = scmp.eq.s32.totalorder %s15, 1
      %p96 = scmp.ne.s32.totalorder %s91, %s93
      %p97 = scmp.eq.s32.totalorder %s15, 0
      %p98 = por %p96, %p97
      %p99 = scmp.ne.s32.totalorder %s91, %s93
      %p100 = scmp.eq.s32.totalorder %s20, 1
      %p101 = por %p99, %p100
      %p102 = scmp.ne.s32.totalorder %s93, %s94
      %p103 = scmp.eq.s32.totalorder %s20, 0
      %p104 = por %p102, %p103
      %p105 = scmp.ne.s32.totalorder %s93, %s94
      %p106 = scmp.eq.s32.totalorder %s21, 1
      %p107 = por %p105, %p106
      %p109 = scmp.ne.s32.totalorder %s94, %s108
      %p110 = scmp.eq.s32.totalorder %s21, 0
      %p111 = por %p109, %p110
      %s113 = sadd.s32 %s112, 1
      %p116 = scmp.eq.s32.totalorder %s15, 1
      %p117 = scmp.ne.s32.totalorder %s112, %s114
      %p118 = scmp.eq.s32.totalorder %s15, 0
      %p119 = por %p117, %p118
      %p120 = scmp.ne.s32.totalorder %s112, %s114
      %p121 = scmp.eq.s32.totalorder %s20, 1
      %p122 = por %p120, %p121
      %p123 = scmp.ne.s32.totalorder %s114, %s115
      %p124 = scmp.eq.s32.totalorder %s20, 0
      %p125 = por %p123, %p124
      %p126 = scmp.ne.s32.totalorder %s114, %s115
      %p127 = scmp.eq.s32.totalorder %s21, 1
      %p128 = por %p126, %p127
      %p130 = scmp.ne.s32.totalorder %s115, %s129
      %p131 = scmp.eq.s32.totalorder %s21, 0
      %p132 = por %p130, %p131
      %s134 = sadd.s32 %s133, 1
      %p137 = scmp.eq.s32.totalorder %s15, 1
      %p138 = scmp.ne.s32.totalorder %s133, %s135
      %p139 = scmp.eq.s32.totalorder %s15, 0
      %p140 = por %p138, %p139
      %p141 = scmp.ne.s32.totalorder %s133, %s135
      %p142 = scmp.eq.s32.totalorder %s20, 1
      %p143 = por %p141, %p142
      %p144 = scmp.ne.s32.totalorder %s135, %s136
      %p145 = scmp.eq.s32.totalorder %s20, 0
      %p146 = por %p144, %p145
      %p147 = scmp.ne.s32.totalorder %s135, %s136
      %p148 = scmp.eq.s32.totalorder %s21, 1
      %p149 = por %p147, %p148
      %p151 = scmp.ne.s32.totalorder %s136, %s150
      %p152 = scmp.eq.s32.totalorder %s21, 0
      %p153 = por %p151, %p152
      %s154 = ssub.s32 %s15, %s22
      %p155 = scmp.eq.s32.totalorder %s154, 0
      %s157 = sadd.s32 %s156, 1
      %s158 = scalar_select %p155, %s156, %s157
      %p161 = pneg %p155
      %p162 = scmp.eq.s32.totalorder %s15, 1
      %p163 = por %p161, %p162
      %p164 = scmp.ne.s32.totalorder %s156, %s159
      %p165 = scmp.eq.s32.totalorder %s15, 0
      %p166 = por %p164, %p165
      %p167 = scmp.ne.s32.totalorder %s156, %s159
      %p168 = scmp.eq.s32.totalorder %s20, 1
      %p169 = por %p167, %p168
      %p170 = scmp.ne.s32.totalorder %s159, %s160
      %p171 = scmp.eq.s32.totalorder %s20, 0
      %p172 = por %p170, %p171
      %p173 = scmp.ne.s32.totalorder %s159, %s160
      %p174 = scmp.eq.s32.totalorder %s21, 1
      %p175 = por %p173, %p174
      %p177 = scmp.ne.s32.totalorder %s160, %s176
      %p178 = scmp.eq.s32.totalorder %s21, 0
      %p179 = por %p177, %p178
      %p180 = scmp.le.s32.totalorder 1, %s15
      %p181 = scmp.lt.s32.totalorder %s15, 3
      %p182 = pnand %p180, %p181
      %p183 = pneg %p182
      // Predicated region
      $region9: #{tpu_custom_call.1} parent=5 // pred_check
        _
      $region10: #{tpu_custom_call.1} parent=5 // pred_check_branch
        %185 = sbr.rel (%p182) target = $region12
      $region11: #{tpu_custom_call.1} parent=5 // pred_region
        %s186 = ssub.s32 %s15, 1
        // Predicated region
        $region13: #{tpu_custom_call.1} parent=11 // pred_check
          %p187 = pneg %p62
        $region14: #{tpu_custom_call.1} parent=11 // pred_check_branch
          %189 = sbr.rel (%p187) target = $region16
        $region15: #{tpu_custom_call.1} parent=11 // pred_region
          _
        $region16: #{tpu_custom_call.1} parent=11 // pred_fallthru
          _
        // Predicated region
        $region17: #{tpu_custom_call.1} parent=11 // pred_check
          %p190 = pneg %p83
        $region18: #{tpu_custom_call.1} parent=11 // pred_check_branch
          %192 = sbr.rel (%p190) target = $region20
        $region19: #{tpu_custom_call.1} parent=11 // pred_region
          _
        $region20: #{tpu_custom_call.1} parent=11 // pred_fallthru
          _
        // Predicated region
        $region21: #{tpu_custom_call.1} parent=11 // pred_check
          %p193 = pneg %p104
        $region22: #{tpu_custom_call.1} parent=11 // pred_check_branch
          %195 = sbr.rel (%p193) target = $region24
        $region23: #{tpu_custom_call.1} parent=11 // pred_region
          _
        $region24: #{tpu_custom_call.1} parent=11 // pred_fallthru
          _
        // Predicated region
        $region25: #{tpu_custom_call.1} parent=11 // pred_check
          %p196 = pneg %p125
        $region26: #{tpu_custom_call.1} parent=11 // pred_check_branch
          %198 = sbr.rel (%p196) target = $region28
        $region27: #{tpu_custom_call.1} parent=11 // pred_region
          _
        $region28: #{tpu_custom_call.1} parent=11 // pred_fallthru
          _
        // Predicated region
        $region29: #{tpu_custom_call.1} parent=11 // pred_check
          %p199 = pneg %p146
        $region30: #{tpu_custom_call.1} parent=11 // pred_check_branch
          %201 = sbr.rel (%p199) target = $region32
        $region31: #{tpu_custom_call.1} parent=11 // pred_region
          _
        $region32: #{tpu_custom_call.1} parent=11 // pred_fallthru
          _
      $region12: #{tpu_custom_call.1} parent=5 // pred_fallthru
        _
      %p202 = scmp.lt.s32.totalorder %s15, 2
      // Predicated region
      $region33: #{tpu_custom_call.1} parent=5 // pred_check
        %p203 = pneg %p202
      $region34: #{tpu_custom_call.1} parent=5 // pred_check_branch
        %205 = sbr.rel (%p203) target = $region36
      $region35: #{tpu_custom_call.1} parent=5 // pred_region
        // Predicated region
        $region37: #{tpu_custom_call.1} parent=35 // pred_check
          %p206 = pneg %p35
        $region38: #{tpu_custom_call.1} parent=35 // pred_check_branch
          %208 = sbr.rel (%p206) target = $region40
        $region39: #{tpu_custom_call.1} parent=35 // pred_region
          %p209 = scmp.lt.s32.totalorder %s15, 1
          %s210 = scalar_select %p209, %s15, 1
          %s211 = smul.addr %s210, 4
          %s212 = smul.addr %s211, 4
          %s213 = scalar_lea.vmem %s0, %s212
        $region40: #{tpu_custom_call.1} parent=35 // pred_fallthru
          _
      $region36: #{tpu_custom_call.1} parent=5 // pred_fallthru
        _
      %p214 = scmp.le.s32.totalorder 1, %s15
      %p215 = scmp.lt.s32.totalorder %s15, 3
      %p216 = pnand %p214, %p215
      %p217 = pneg %p216
      // Predicated region
      $region41: #{tpu_custom_call.1} parent=5 // pred_check
        _
      $region42: #{tpu_custom_call.1} parent=5 // pred_check_branch
        %219 = sbr.rel (%p216) target = $region44
      $region43: #{tpu_custom_call.1} parent=5 // pred_region
        %s220 = ssub.s32 %s15, 1
        %p221 = scmp.lt.s32.totalorder %s20, 1
        %s222 = scalar_select %p221, %s20, 1
        %s223 = smul.addr %s222, 4
        %s224 = smul.addr %s223, 4
        %s225 = scalar_lea.vmem %s0, %s224
        %p226 = pneg %p41
        %p227 = pneg %p38
        %p228 = pneg %p62
        %p229 = pneg %p59
        %p230 = pneg %p83
        %p231 = pneg %p80
        %p232 = pneg %p104
        %p233 = pneg %p101
        %p234 = pneg %p125
        %p235 = pneg %p122
        %p236 = pneg %p146
        %p237 = pneg %p143
        %p238 = pneg %p172
        %p239 = pneg %p169
        %s240 = sand.u32 %s159, 1
        %s241 = scalar_lea.sflag [#allocation3], %s240
        %s242 = sand.u32 %s159, 1
        %s243 = smul.addr %s242, 12
        %s244 = scalar_lea.vmem [#allocation2], %s243
        %p245 = scmp.lt.s32.totalorder %s20, 1
        %s246 = scalar_select %p245, %s20, 1
        %s247 = smul.addr %s246, 4
        %s248 = smul.addr %s247, 4
        %s249 = scalar_lea.vmem %s0, %s248
        %v251 = vld [vmem:[%s249] sm:$0xff]
        %v252 = vld [vmem:[%s249 + $0x8] sm:$0xff]
        %v255 = vcombine.high %v251, %v251
        %v256 = vcombine.high %v252, %v252
        %v259 = vpack.c.bf16 %v251, %v251
        %v260 = vpack.c.bf16 %v255, %v255
        %v261 = vpack.c.bf16 %v252, %v252
        %v262 = vpack.c.bf16 %v256, %v256
        %v263 = vld [vmem:[%s2] sm:$0x3]
        %s264 = scalar_lea.vmem %s2, 2
        %v265 = vld [vmem:[%s264] sm:$0x3]
        %269 = vrot.lane.b32.xlu0 %v259, 127
        %v270 = vpop.permute.xlu0 %269
        %271 = vrot.lane.b32.xlu0 %v260, 127
        %v272 = vpop.permute.xlu0 %271
        %273 = vrot.lane.b32.xlu0 %v261, 127
        %v274 = vpop.permute.xlu0 %273
        %vm275 = vcmask 1039360
        %v276 = vsel %vm275, %v270, %v272
        %v277 = vsel %vm275, %v272, %v274
        %vm278 = vcmask 31744
        %v280 = vsel %vm278, %v265, 0
        %vm282 = vcmask 1041408
        %v284 = vsel %vm282, %v276, 0
        %v287 = vsel %vm282, %v277, 0
        %v290 = vsel %vm282, %v274, 0
        %292 = vmatprep.subr.bf16.mxu0 %v287
        %293 = vmatpush1.bf16.msra.mxu0 %v284
        %294 = vmatprep.subr.bf16.mxu0 0
        %295 = vmatpush1.bf16.msra.mxu0 0
        %296 = vmatprep.subr.bf16.mxu0 0
        %297 = vmatpush1.bf16.msra.mxu0 0
        %298 = vmatprep.subr.bf16.mxu0 0
        %299 = vmatpush1.bf16.msra.mxu0 0
        %300 = vmatprep.subr.bf16.mxu0 0
        %301 = vmatpush1.bf16.msra.mxu0 0
        %302 = vmatprep.subr.bf16.mxu0 0
        %303 = vmatpush1.bf16.msra.mxu0 0
        %304 = vmatprep.subr.bf16.mxu0 0
        %305 = vmatpush1.bf16.msra.mxu0 0
        %306 = vmatprep.subr.bf16.mxu0 0
        %307 = vmatpush1.bf16.msra.mxu0 0
        %308 = vmatprep.subr.bf16.mxu0 0
        %309 = vmatpush1.bf16.msra.mxu0 0
        %310 = vmatprep.subr.bf16.mxu0 0
        %311 = vmatpush1.bf16.msra.mxu0 0
        %312 = vmatprep.subr.bf16.mxu0 0
        %313 = vmatpush1.bf16.msra.mxu0 0
        %314 = vmatprep.subr.bf16.mxu0 0
        %315 = vmatpush1.bf16.msra.mxu0 0
        %316 = vmatprep.subr.bf16.mxu0 0
        %317 = vmatpush1.bf16.msra.mxu0 0
        %318 = vmatprep.subr.bf16.mxu0 0
        %319 = vmatpush1.bf16.msra.mxu0 0
        %320 = vmatprep.subr.bf16.mxu0 0
        %321 = vmatpush1.bf16.msra.mxu0 0
        %322 = vmatprep.subr.bf16.mxu0 0
        %323 = vmatpush1.bf16.msra.mxu0 0
        %324 = vmatprep.mubr.bf16.mxu0 0
        %325 = vmatmul.mubr.bf16.gmra.mrb[0].mxu0 %v280
        %v326 = vpop.f32.mrb[0].mxu0
        %v327 = vadd.f32 0.0, %v326
        %v328 = vpop.f32.mrb[0].mxu0
        %v329 = vadd.f32 0.0, %v328
        %v330 = vpop.f32.mrb[0].mxu0
        %v331 = vpop.f32.mrb[0].mxu0
        %332 = vdwg.mxu0
        %333 = vmatprep.subr.bf16.mxu0 0
        %334 = vmatpush1.bf16.msra.mxu0 %v290
        %335 = vmatprep.subr.bf16.mxu0 0
        %336 = vmatpush1.bf16.msra.mxu0 0
        %337 = vmatprep.subr.bf16.mxu0 0
        %338 = vmatpush1.bf16.msra.mxu0 0
        %339 = vmatprep.subr.bf16.mxu0 0
        %340 = vmatpush1.bf16.msra.mxu0 0
        %341 = vmatprep.subr.bf16.mxu0 0
        %342 = vmatpush1.bf16.msra.mxu0 0
        %343 = vmatprep.subr.bf16.mxu0 0
        %344 = vmatpush1.bf16.msra.mxu0 0
        %345 = vmatprep.subr.bf16.mxu0 0
        %346 = vmatpush1.bf16.msra.mxu0 0
        %347 = vmatprep.subr.bf16.mxu0 0
        %348 = vmatpush1.bf16.msra.mxu0 0
        %349 = vmatprep.subr.bf16.mxu0 0
        %350 = vmatpush1.bf16.msra.mxu0 0
        %351 = vmatprep.subr.bf16.mxu0 0
        %352 = vmatpush1.bf16.msra.mxu0 0
        %353 = vmatprep.subr.bf16.mxu0 0
        %354 = vmatpush1.bf16.msra.mxu0 0
        %355 = vmatprep.subr.bf16.mxu0 0
        %356 = vmatpush1.bf16.msra.mxu0 0
        %357 = vmatprep.subr.bf16.mxu0 0
        %358 = vmatpush1.bf16.msra.mxu0 0
        %359 = vmatprep.subr.bf16.mxu0 0
        %360 = vmatpush1.bf16.msra.mxu0 0
        %361 = vmatprep.subr.bf16.mxu0 0
        %362 = vmatpush1.bf16.msra.mxu0 0
        %363 = vmatprep.subr.bf16.mxu0 0
        %364 = vmatpush1.bf16.msra.mxu0 0
        %365 = vmatprep.mubr.bf16.mxu0 0
        %366 = vmatmul.mubr.bf16.gmra.mrb[0].mxu0 %v280
        %v367 = vpop.f32.mrb[0].mxu0
        %v368 = vadd.f32 0.0, %v367
        %v369 = vpop.f32.mrb[0].mxu0
        %v370 = vpop.f32.mrb[0].mxu0
        %v371 = vpop.f32.mrb[0].mxu0
        %372 = vdwg.mxu0
        %v374 = vsel %vm278, %v263, 0
        %v377 = vsel %vm282, %v259, 0
        %v380 = vsel %vm282, %v260, 0
        %v383 = vsel %vm282, %v261, 0
        %385 = vmatprep.subr.bf16.mxu0 %v380
        %386 = vmatpush1.bf16.msra.mxu0 %v377
        %387 = vmatprep.subr.bf16.mxu0 0
        %388 = vmatpush1.bf16.msra.mxu0 0
        %389 = vmatprep.subr.bf16.mxu0 0
        %390 = vmatpush1.bf16.msra.mxu0 0
        %391 = vmatprep.subr.bf16.mxu0 0
        %392 = vmatpush1.bf16.msra.mxu0 0
        %393 = vmatprep.subr.bf16.mxu0 0
        %394 = vmatpush1.bf16.msra.mxu0 0
        %395 = vmatprep.subr.bf16.mxu0 0
        %396 = vmatpush1.bf16.msra.mxu0 0
        %397 = vmatprep.subr.bf16.mxu0 0
        %398 = vmatpush1.bf16.msra.mxu0 0
        %399 = vmatprep.subr.bf16.mxu0 0
        %400 = vmatpush1.bf16.msra.mxu0 0
        %401 = vmatprep.subr.bf16.mxu0 0
        %402 = vmatpush1.bf16.msra.mxu0 0
        %403 = vmatprep.subr.bf16.mxu0 0
        %404 = vmatpush1.bf16.msra.mxu0 0
        %405 = vmatprep.subr.bf16.mxu0 0
        %406 = vmatpush1.bf16.msra.mxu0 0
        %407 = vmatprep.subr.bf16.mxu0 0
        %408 = vmatpush1.bf16.msra.mxu0 0
        %409 = vmatprep.subr.bf16.mxu0 0
        %410 = vmatpush1.bf16.msra.mxu0 0
        %411 = vmatprep.subr.bf16.mxu0 0
        %412 = vmatpush1.bf16.msra.mxu0 0
        %413 = vmatprep.subr.bf16.mxu0 0
        %414 = vmatpush1.bf16.msra.mxu0 0
        %415 = vmatprep.subr.bf16.mxu0 0
        %416 = vmatpush1.bf16.msra.mxu0 0
        %417 = vmatprep.mubr.bf16.mxu0 0
        %418 = vmatmul.mubr.bf16.gmra.mrb[0].mxu0 %v374
        %v419 = vpop.f32.mrb[0].mxu0
        %v420 = vadd.f32 %v327, %v419
        %v421 = vpop.f32.mrb[0].mxu0
        %v422 = vadd.f32 %v329, %v421
        %v423 = vpop.f32.mrb[0].mxu0
        %v424 = vpop.f32.mrb[0].mxu0
        %425 = vdwg.mxu0
        %426 = vmatprep.subr.bf16.mxu0 0
        %427 = vmatpush1.bf16.msra.mxu0 %v383
        %428 = vmatprep.subr.bf16.mxu0 0
        %429 = vmatpush1.bf16.msra.mxu0 0
        %430 = vmatprep.subr.bf16.mxu0 0
        %431 = vmatpush1.bf16.msra.mxu0 0
        %432 = vmatprep.subr.bf16.mxu0 0
        %433 = vmatpush1.bf16.msra.mxu0 0
        %434 = vmatprep.subr.bf16.mxu0 0
        %435 = vmatpush1.bf16.msra.mxu0 0
        %436 = vmatprep.subr.bf16.mxu0 0
        %437 = vmatpush1.bf16.msra.mxu0 0
        %438 = vmatprep.subr.bf16.mxu0 0
        %439 = vmatpush1.bf16.msra.mxu0 0
        %440 = vmatprep.subr.bf16.mxu0 0
        %441 = vmatpush1.bf16.msra.mxu0 0
        %442 = vmatprep.subr.bf16.mxu0 0
        %443 = vmatpush1.bf16.msra.mxu0 0
        %444 = vmatprep.subr.bf16.mxu0 0
        %445 = vmatpush1.bf16.msra.mxu0 0
        %446 = vmatprep.subr.bf16.mxu0 0
        %447 = vmatpush1.bf16.msra.mxu0 0
        %448 = vmatprep.subr.bf16.mxu0 0
        %449 = vmatpush1.bf16.msra.mxu0 0
        %450 = vmatprep.subr.bf16.mxu0 0
        %451 = vmatpush1.bf16.msra.mxu0 0
        %452 = vmatprep.subr.bf16.mxu0 0
        %453 = vmatpush1.bf16.msra.mxu0 0
        %454 = vmatprep.subr.bf16.mxu0 0
        %455 = vmatpush1.bf16.msra.mxu0 0
        %456 = vmatprep.subr.bf16.mxu0 0
        %457 = vmatpush1.bf16.msra.mxu0 0
        %458 = vmatprep.mubr.bf16.mxu0 0
        %459 = vmatmul.mubr.bf16.gmra.mrb[0].mxu0 %v374
        %v460 = vpop.f32.mrb[0].mxu0
        %v461 = vadd.f32 %v368, %v460
        %v462 = vpop.f32.mrb[0].mxu0
        %v463 = vpop.f32.mrb[0].mxu0
        %v464 = vpop.f32.mrb[0].mxu0
        %465 = vdwg.mxu0
        %s466 = scalar_lea.vmem %s2, 4
        %v467 = vld [vmem:[%s466] sm:$0x3]
        %468 = vrot.lane.b32.xlu0 %v259, 126
        %v469 = vpop.permute.xlu0 %468
        %470 = vrot.lane.b32.xlu0 %v260, 126
        %v471 = vpop.permute.xlu0 %470
        %472 = vrot.lane.b32.xlu0 %v261, 126
        %v473 = vpop.permute.xlu0 %472
        %vm474 = vcmask 1031168
        %v475 = vsel %vm474, %v469, %v471
        %v476 = vsel %vm474, %v471, %v473
        %v478 = vsel %vm278, %v467, 0
        %v481 = vsel %vm282, %v475, 0
        %v484 = vsel %vm282, %v476, 0
        %v487 = vsel %vm282, %v473, 0
        %489 = vmatprep.subr.bf16.mxu0 %v484
        %490 = vmatpush1.bf16.msra.mxu0 %v481
        %491 = vmatprep.subr.bf16.mxu0 0
        %492 = vmatpush1.bf16.msra.mxu0 0
        %493 = vmatprep.subr.bf16.mxu0 0
        %494 = vmatpush1.bf16.msra.mxu0 0
        %495 = vmatprep.subr.bf16.mxu0 0
        %496 = vmatpush1.bf16.msra.mxu0 0
        %497 = vmatprep.subr.bf16.mxu0 0
        %498 = vmatpush1.bf16.msra.mxu0 0
        %499 = vmatprep.subr.bf16.mxu0 0
        %500 = vmatpush1.bf16.msra.mxu0 0
        %501 = vmatprep.subr.bf16.mxu0 0
        %502 = vmatpush1.bf16.msra.mxu0 0
        %503 = vmatprep.subr.bf16.mxu0 0
        %504 = vmatpush1.bf16.msra.mxu0 0
        %505 = vmatprep.subr.bf16.mxu0 0
        %506 = vmatpush1.bf16.msra.mxu0 0
        %507 = vmatprep.subr.bf16.mxu0 0
        %508 = vmatpush1.bf16.msra.mxu0 0
        %509 = vmatprep.subr.bf16.mxu0 0
        %510 = vmatpush1.bf16.msra.mxu0 0
        %511 = vmatprep.subr.bf16.mxu0 0
        %512 = vmatpush1.bf16.msra.mxu0 0
        %513 = vmatprep.subr.bf16.mxu0 0
        %514 = vmatpush1.bf16.msra.mxu0 0
        %515 = vmatprep.subr.bf16.mxu0 0
        %516 = vmatpush1.bf16.msra.mxu0 0
        %517 = vmatprep.subr.bf16.mxu0 0
        %518 = vmatpush1.bf16.msra.mxu0 0
        %519 = vmatprep.subr.bf16.mxu0 0
        %520 = vmatpush1.bf16.msra.mxu0 0
        %521 = vmatprep.mubr.bf16.mxu0 0
        %522 = vmatmul.mubr.bf16.gmra.mrb[0].mxu0 %v478
        %v523 = vpop.f32.mrb[0].mxu0
        %v524 = vadd.f32 0.0, %v523
        %v525 = vpop.f32.mrb[0].mxu0
        %v526 = vadd.f32 0.0, %v525
        %v527 = vpop.f32.mrb[0].mxu0
        %v528 = vpop.f32.mrb[0].mxu0
        %529 = vdwg.mxu0
        %530 = vmatprep.subr.bf16.mxu0 0
        %531 = vmatpush1.bf16.msra.mxu0 %v487
        %532 = vmatprep.subr.bf16.mxu0 0
        %533 = vmatpush1.bf16.msra.mxu0 0
        %534 = vmatprep.subr.bf16.mxu0 0
        %535 = vmatpush1.bf16.msra.mxu0 0
        %536 = vmatprep.subr.bf16.mxu0 0
        %537 = vmatpush1.bf16.msra.mxu0 0
        %538 = vmatprep.subr.bf16.mxu0 0
        %539 = vmatpush1.bf16.msra.mxu0 0
        %540 = vmatprep.subr.bf16.mxu0 0
        %541 = vmatpush1.bf16.msra.mxu0 0
        %542 = vmatprep.subr.bf16.mxu0 0
        %543 = vmatpush1.bf16.msra.mxu0 0
        %544 = vmatprep.subr.bf16.mxu0 0
        %545 = vmatpush1.bf16.msra.mxu0 0
        %546 = vmatprep.subr.bf16.mxu0 0
        %547 = vmatpush1.bf16.msra.mxu0 0
        %548 = vmatprep.subr.bf16.mxu0 0
        %549 = vmatpush1.bf16.msra.mxu0 0
        %550 = vmatprep.subr.bf16.mxu0 0
        %551 = vmatpush1.bf16.msra.mxu0 0
        %552 = vmatprep.subr.bf16.mxu0 0
        %553 = vmatpush1.bf16.msra.mxu0 0
        %554 = vmatprep.subr.bf16.mxu0 0
        %555 = vmatpush1.bf16.msra.mxu0 0
        %556 = vmatprep.subr.bf16.mxu0 0
        %557 = vmatpush1.bf16.msra.mxu0 0
        %558 = vmatprep.subr.bf16.mxu0 0
        %559 = vmatpush1.bf16.msra.mxu0 0
        %560 = vmatprep.subr.bf16.mxu0 0
        %561 = vmatpush1.bf16.msra.mxu0 0
        %562 = vmatprep.mubr.bf16.mxu0 0
        %563 = vmatmul.mubr.bf16.gmra.mrb[0].mxu0 %v478
        %v564 = vpop.f32.mrb[0].mxu0
        %v565 = vadd.f32 0.0, %v564
        %v566 = vpop.f32.mrb[0].mxu0
        %v567 = vpop.f32.mrb[0].mxu0
        %v568 = vpop.f32.mrb[0].mxu0
        %569 = vdwg.mxu0
        %v570 = vadd.f32 %v420, %v524
        %v571 = vadd.f32 %v422, %v526
        %v572 = vadd.f32 %v461, %v565
        %s573 = scalar_lea.vmem %s2, 6
        %v574 = vld [vmem:[%s573] sm:$0x3]
        %575 = vrot.lane.b32.xlu0 %v259, 108
        %v576 = vpop.permute.xlu0 %575
        %577 = vrot.lane.b32.xlu0 %v260, 108
        %v578 = vpop.permute.xlu0 %577
        %579 = vrot.lane.b32.xlu0 %v261, 108
        %v580 = vpop.permute.xlu0 %579
        %vm581 = vcmask 883712
        %v582 = vsel %vm581, %v576, %v578
        %v583 = vsel %vm581, %v578, %v580
        %v585 = vsel %vm278, %v574, 0
        %v588 = vsel %vm282, %v582, 0
        %v591 = vsel %vm282, %v583, 0
        %v594 = vsel %vm282, %v580, 0
        %596 = vmatprep.subr.bf16.mxu0 %v591
        %597 = vmatpush1.bf16.msra.mxu0 %v588
        %598 = vmatprep.subr.bf16.mxu0 0
        %599 = vmatpush1.bf16.msra.mxu0 0
        %600 = vmatprep.subr.bf16.mxu0 0
        %601 = vmatpush1.bf16.msra.mxu0 0
        %602 = vmatprep.subr.bf16.mxu0 0
        %603 = vmatpush1.bf16.msra.mxu0 0
        %604 = vmatprep.subr.bf16.mxu0 0
        %605 = vmatpush1.bf16.msra.mxu0 0
        %606 = vmatprep.subr.bf16.mxu0 0
        %607 = vmatpush1.bf16.msra.mxu0 0
        %608 = vmatprep.subr.bf16.mxu0 0
        %609 = vmatpush1.bf16.msra.mxu0 0
        %610 = vmatprep.subr.bf16.mxu0 0
        %611 = vmatpush1.bf16.msra.mxu0 0
        %612 = vmatprep.subr.bf16.mxu0 0
        %613 = vmatpush1.bf16.msra.mxu0 0
        %614 = vmatprep.subr.bf16.mxu0 0
        %615 = vmatpush1.bf16.msra.mxu0 0
        %616 = vmatprep.subr.bf16.mxu0 0
        %617 = vmatpush1.bf16.msra.mxu0 0
        %618 = vmatprep.subr.bf16.mxu0 0
        %619 = vmatpush1.bf16.msra.mxu0 0
        %620 = vmatprep.subr.bf16.mxu0 0
        %621 = vmatpush1.bf16.msra.mxu0 0
        %622 = vmatprep.subr.bf16.mxu0 0
        %623 = vmatpush1.bf16.msra.mxu0 0
        %624 = vmatprep.subr.bf16.mxu0 0
        %625 = vmatpush1.bf16.msra.mxu0 0
        %626 = vmatprep.subr.bf16.mxu0 0
        %627 = vmatpush1.bf16.msra.mxu0 0
        %628 = vmatprep.mubr.bf16.mxu0 0
        %629 = vmatmul.mubr.bf16.gmra.mrb[0].mxu0 %v585
        %v630 = vpop.f32.mrb[0].mxu0
        %v631 = vadd.f32 0.0, %v630
        %v632 = vpop.f32.mrb[0].mxu0
        %v633 = vadd.f32 0.0, %v632
        %v634 = vpop.f32.mrb[0].mxu0
        %v635 = vpop.f32.mrb[0].mxu0
        %636 = vdwg.mxu0
        %637 = vmatprep.subr.bf16.mxu0 0
        %638 = vmatpush1.bf16.msra.mxu0 %v594
        %639 = vmatprep.subr.bf16.mxu0 0
        %640 = vmatpush1.bf16.msra.mxu0 0
        %641 = vmatprep.subr.bf16.mxu0 0
        %642 = vmatpush1.bf16.msra.mxu0 0
        %643 = vmatprep.subr.bf16.mxu0 0
        %644 = vmatpush1.bf16.msra.mxu0 0
        %645 = vmatprep.subr.bf16.mxu0 0
        %646 = vmatpush1.bf16.msra.mxu0 0
        %647 = vmatprep.subr.bf16.mxu0 0
        %648 = vmatpush1.bf16.msra.mxu0 0
        %649 = vmatprep.subr.bf16.mxu0 0
        %650 = vmatpush1.bf16.msra.mxu0 0
        %651 = vmatprep.subr.bf16.mxu0 0
        %652 = vmatpush1.bf16.msra.mxu0 0
        %653 = vmatprep.subr.bf16.mxu0 0
        %654 = vmatpush1.bf16.msra.mxu0 0
        %655 = vmatprep.subr.bf16.mxu0 0
        %656 = vmatpush1.bf16.msra.mxu0 0
        %657 = vmatprep.subr.bf16.mxu0 0
        %658 = vmatpush1.bf16.msra.mxu0 0
        %659 = vmatprep.subr.bf16.mxu0 0
        %660 = vmatpush1.bf16.msra.mxu0 0
        %661 = vmatprep.subr.bf16.mxu0 0
        %662 = vmatpush1.bf16.msra.mxu0 0
        %663 = vmatprep.subr.bf16.mxu0 0
        %664 = vmatpush1.bf16.msra.mxu0 0
        %665 = vmatprep.subr.bf16.mxu0 0
        %666 = vmatpush1.bf16.msra.mxu0 0
        %667 = vmatprep.subr.bf16.mxu0 0
        %668 = vmatpush1.bf16.msra.mxu0 0
        %669 = vmatprep.mubr.bf16.mxu0 0
        %670 = vmatmul.mubr.bf16.gmra.mrb[0].mxu0 %v585
        %v671 = vpop.f32.mrb[0].mxu0
        %v672 = vadd.f32 0.0, %v671
        %v673 = vpop.f32.mrb[0].mxu0
        %v674 = vpop.f32.mrb[0].mxu0
        %v675 = vpop.f32.mrb[0].mxu0
        %676 = vdwg.mxu0
        %v677 = vadd.f32 %v570, %v631
        %v678 = vadd.f32 %v571, %v633
        %v679 = vadd.f32 %v572, %v672
        %s680 = scalar_lea.vmem %s2, 8
        %v681 = vld [vmem:[%s680] sm:$0x3]
        %682 = vrot.lane.b32.xlu0 %v259, 107
        %v683 = vpop.permute.xlu0 %682
        %684 = vrot.lane.b32.xlu0 %v260, 107
        %v685 = vpop.permute.xlu0 %684
        %686 = vrot.lane.b32.xlu0 %v261, 107
        %v687 = vpop.permute.xlu0 %686
        %vm688 = vcmask 875520
        %v689 = vsel %vm688, %v683, %v685
        %v690 = vsel %vm688, %v685, %v687
        %v692 = vsel %vm278, %v681, 0
        %v695 = vsel %vm282, %v689, 0
        %v698 = vsel %vm282, %v690, 0
        %v701 = vsel %vm282, %v687, 0
        %703 = vmatprep.subr.bf16.mxu0 %v698
        %704 = vmatpush1.bf16.msra.mxu0 %v695
        %705 = vmatprep.subr.bf16.mxu0 0
        %706 = vmatpush1.bf16.msra.mxu0 0
        %707 = vmatprep.subr.bf16.mxu0 0
        %708 = vmatpush1.bf16.msra.mxu0 0
        %709 = vmatprep.subr.bf16.mxu0 0
        %710 = vmatpush1.bf16.msra.mxu0 0
        %711 = vmatprep.subr.bf16.mxu0 0
        %712 = vmatpush1.bf16.msra.mxu0 0
        %713 = vmatprep.subr.bf16.mxu0 0
        %714 = vmatpush1.bf16.msra.mxu0 0
        %715 = vmatprep.subr.bf16.mxu0 0
        %716 = vmatpush1.bf16.msra.mxu0 0
        %717 = vmatprep.subr.bf16.mxu0 0
        %718 = vmatpush1.bf16.msra.mxu0 0
        %719 = vmatprep.subr.bf16.mxu0 0
        %720 = vmatpush1.bf16.msra.mxu0 0
        %721 = vmatprep.subr.bf16.mxu0 0
        %722 = vmatpush1.bf16.msra.mxu0 0
        %723 = vmatprep.subr.bf16.mxu0 0
        %724 = vmatpush1.bf16.msra.mxu0 0
        %725 = vmatprep.subr.bf16.mxu0 0
        %726 = vmatpush1.bf16.msra.mxu0 0
        %727 = vmatprep.subr.bf16.mxu0 0
        %728 = vmatpush1.bf16.msra.mxu0 0
        %729 = vmatprep.subr.bf16.mxu0 0
        %730 = vmatpush1.bf16.msra.mxu0 0
        %731 = vmatprep.subr.bf16.mxu0 0
        %732 = vmatpush1.bf16.msra.mxu0 0
        %733 = vmatprep.subr.bf16.mxu0 0
        %734 = vmatpush1.bf16.msra.mxu0 0
        %735 = vmatprep.mubr.bf16.mxu0 0
        %736 = vmatmul.mubr.bf16.gmra.mrb[0].mxu0 %v692
        %v737 = vpop.f32.mrb[0].mxu0
        %v738 = vadd.f32 0.0, %v737
        %v739 = vpop.f32.mrb[0].mxu0
        %v740 = vadd.f32 0.0, %v739
        %v741 = vpop.f32.mrb[0].mxu0
        %v742 = vpop.f32.mrb[0].mxu0
        %743 = vdwg.mxu0
        %744 = vmatprep.subr.bf16.mxu0 0
        %745 = vmatpush1.bf16.msra.mxu0 %v701
        %746 = vmatprep.subr.bf16.mxu0 0
        %747 = vmatpush1.bf16.msra.mxu0 0
        %748 = vmatprep.subr.bf16.mxu0 0
        %749 = vmatpush1.bf16.msra.mxu0 0
        %750 = vmatprep.subr.bf16.mxu0 0
        %751 = vmatpush1.bf16.msra.mxu0 0
        %752 = vmatprep.subr.bf16.mxu0 0
        %753 = vmatpush1.bf16.msra.mxu0 0
        %754 = vmatprep.subr.bf16.mxu0 0
        %755 = vmatpush1.bf16.msra.mxu0 0
        %756 = vmatprep.subr.bf16.mxu0 0
        %757 = vmatpush1.bf16.msra.mxu0 0
        %758 = vmatprep.subr.bf16.mxu0 0
        %759 = vmatpush1.bf16.msra.mxu0 0
        %760 = vmatprep.subr.bf16.mxu0 0
        %761 = vmatpush1.bf16.msra.mxu0 0
        %762 = vmatprep.subr.bf16.mxu0 0
        %763 = vmatpush1.bf16.msra.mxu0 0
        %764 = vmatprep.subr.bf16.mxu0 0
        %765 = vmatpush1.bf16.msra.mxu0 0
        %766 = vmatprep.subr.bf16.mxu0 0
        %767 = vmatpush1.bf16.msra.mxu0 0
        %768 = vmatprep.subr.bf16.mxu0 0
        %769 = vmatpush1.bf16.msra.mxu0 0
        %770 = vmatprep.subr.bf16.mxu0 0
        %771 = vmatpush1.bf16.msra.mxu0 0
        %772 = vmatprep.subr.bf16.mxu0 0
        %773 = vmatpush1.bf16.msra.mxu0 0
        %774 = vmatprep.subr.bf16.mxu0 0
        %775 = vmatpush1.bf16.msra.mxu0 0
        %776 = vmatprep.mubr.bf16.mxu0 0
        %777 = vmatmul.mubr.bf16.gmra.mrb[0].mxu0 %v692
        %v778 = vpop.f32.mrb[0].mxu0
        %v779 = vadd.f32 0.0, %v778
        %v780 = vpop.f32.mrb[0].mxu0
        %v781 = vpop.f32.mrb[0].mxu0
        %v782 = vpop.f32.mrb[0].mxu0
        %783 = vdwg.mxu0
        %v784 = vadd.f32 %v677, %v738
        %v785 = vadd.f32 %v678, %v740
        %v786 = vadd.f32 %v679, %v779
        %s787 = scalar_lea.vmem %s2, 10
        %v788 = vld [vmem:[%s787] sm:$0x3]
        %789 = vrot.lane.b32.xlu0 %v259, 106
        %v790 = vpop.permute.xlu0 %789
        %791 = vrot.lane.b32.xlu0 %v260, 106
        %v792 = vpop.permute.xlu0 %791
        %793 = vrot.lane.b32.xlu0 %v261, 106
        %v794 = vpop.permute.xlu0 %793
        %vm795 = vcmask 867328
        %v796 = vsel %vm795, %v790, %v792
        %v797 = vsel %vm795, %v792, %v794
        %v799 = vsel %vm278, %v788, 0
        %v802 = vsel %vm282, %v796, 0
        %v805 = vsel %vm282, %v797, 0
        %v808 = vsel %vm282, %v794, 0
        %810 = vmatprep.subr.bf16.mxu0 %v805
        %811 = vmatpush1.bf16.msra.mxu0 %v802
        %812 = vmatprep.subr.bf16.mxu0 0
        %813 = vmatpush1.bf16.msra.mxu0 0
        %814 = vmatprep.subr.bf16.mxu0 0
        %815 = vmatpush1.bf16.msra.mxu0 0
        %816 = vmatprep.subr.bf16.mxu0 0
        %817 = vmatpush1.bf16.msra.mxu0 0
        %818 = vmatprep.subr.bf16.mxu0 0
        %819 = vmatpush1.bf16.msra.mxu0 0
        %820 = vmatprep.subr.bf16.mxu0 0
        %821 = vmatpush1.bf16.msra.mxu0 0
        %822 = vmatprep.subr.bf16.mxu0 0
        %823 = vmatpush1.bf16.msra.mxu0 0
        %824 = vmatprep.subr.bf16.mxu0 0
        %825 = vmatpush1.bf16.msra.mxu0 0
        %826 = vmatprep.subr.bf16.mxu0 0
        %827 = vmatpush1.bf16.msra.mxu0 0
        %828 = vmatprep.subr.bf16.mxu0 0
        %829 = vmatpush1.bf16.msra.mxu0 0
        %830 = vmatprep.subr.bf16.mxu0 0
        %831 = vmatpush1.bf16.msra.mxu0 0
        %832 = vmatprep.subr.bf16.mxu0 0
        %833 = vmatpush1.bf16.msra.mxu0 0
        %834 = vmatprep.subr.bf16.mxu0 0
        %835 = vmatpush1.bf16.msra.mxu0 0
        %836 = vmatprep.subr.bf16.mxu0 0
        %837 = vmatpush1.bf16.msra.mxu0 0
        %838 = vmatprep.subr.bf16.mxu0 0
        %839 = vmatpush1.bf16.msra.mxu0 0
        %840 = vmatprep.subr.bf16.mxu0 0
        %841 = vmatpush1.bf16.msra.mxu0 0
        %842 = vmatprep.mubr.bf16.mxu0 0
        %843 = vmatmul.mubr.bf16.gmra.mrb[0].mxu0 %v799
        %v844 = vpop.f32.mrb[0].mxu0
        %v845 = vadd.f32 0.0, %v844
        %v846 = vpop.f32.mrb[0].mxu0
        %v847 = vadd.f32 0.0, %v846
        %v848 = vpop.f32.mrb[0].mxu0
        %v849 = vpop.f32.mrb[0].mxu0
        %850 = vdwg.mxu0
        %851 = vmatprep.subr.bf16.mxu0 0
        %852 = vmatpush1.bf16.msra.mxu0 %v808
        %853 = vmatprep.subr.bf16.mxu0 0
        %854 = vmatpush1.bf16.msra.mxu0 0
        %855 = vmatprep.subr.bf16.mxu0 0
        %856 = vmatpush1.bf16.msra.mxu0 0
        %857 = vmatprep.subr.bf16.mxu0 0
        %858 = vmatpush1.bf16.msra.mxu0 0
        %859 = vmatprep.subr.bf16.mxu0 0
        %860 = vmatpush1.bf16.msra.mxu0 0
        %861 = vmatprep.subr.bf16.mxu0 0
        %862 = vmatpush1.bf16.msra.mxu0 0
        %863 = vmatprep.subr.bf16.mxu0 0
        %864 = vmatpush1.bf16.msra.mxu0 0
        %865 = vmatprep.subr.bf16.mxu0 0
        %866 = vmatpush1.bf16.msra.mxu0 0
        %867 = vmatprep.subr.bf16.mxu0 0
        %868 = vmatpush1.bf16.msra.mxu0 0
        %869 = vmatprep.subr.bf16.mxu0 0
        %870 = vmatpush1.bf16.msra.mxu0 0
        %871 = vmatprep.subr.bf16.mxu0 0
        %872 = vmatpush1.bf16.msra.mxu0 0
        %873 = vmatprep.subr.bf16.mxu0 0
        %874 = vmatpush1.bf16.msra.mxu0 0
        %875 = vmatprep.subr.bf16.mxu0 0
        %876 = vmatpush1.bf16.msra.mxu0 0
        %877 = vmatprep.subr.bf16.mxu0 0
        %878 = vmatpush1.bf16.msra.mxu0 0
        %879 = vmatprep.subr.bf16.mxu0 0
        %880 = vmatpush1.bf16.msra.mxu0 0
        %881 = vmatprep.subr.bf16.mxu0 0
        %882 = vmatpush1.bf16.msra.mxu0 0
        %883 = vmatprep.mubr.bf16.mxu0 0
        %884 = vmatmul.mubr.bf16.gmra.mrb[0].mxu0 %v799
        %v885 = vpop.f32.mrb[0].mxu0
        %v886 = vadd.f32 0.0, %v885
        %v887 = vpop.f32.mrb[0].mxu0
        %v888 = vpop.f32.mrb[0].mxu0
        %v889 = vpop.f32.mrb[0].mxu0
        %890 = vdwg.mxu0
        %v891 = vadd.f32 %v784, %v845
        %v892 = vadd.f32 %v785, %v847
        %v893 = vadd.f32 %v786, %v886
        %s894 = scalar_lea.vmem %s2, 12
        %v895 = vld [vmem:[%s894] sm:$0x3]
        %897 = vrot.lane.b32.xlu0 %v259, 88
        %v898 = vpop.permute.xlu0 %897
        %899 = vrot.lane.b32.xlu0 %v260, 88
        %v900 = vpop.permute.xlu0 %899
        %901 = vrot.lane.b32.xlu0 %v261, 88
        %v902 = vpop.permute.xlu0 %901
        %903 = vrot.lane.b32.xlu0 %v262, 88
        %v904 = vpop.permute.xlu0 %903
        %vm905 = vcmask 719872
        %v906 = vsel %vm905, %v898, %v900
        %v907 = vsel %vm905, %v900, %v902
        %v908 = vsel %vm905, %v902, %v904
        %v910 = vsel %vm278, %v895, 0
        %v913 = vsel %vm282, %v906, 0
        %v916 = vsel %vm282, %v907, 0
        %v919 = vsel %vm282, %v908, 0
        %921 = vmatprep.subr.bf16.mxu0 %v916
        %922 = vmatpush1.bf16.msra.mxu0 %v913
        %923 = vmatprep.subr.bf16.mxu0 0
        %924 = vmatpush1.bf16.msra.mxu0 0
        %925 = vmatprep.subr.bf16.mxu0 0
        %926 = vmatpush1.bf16.msra.mxu0 0
        %927 = vmatprep.subr.bf16.mxu0 0
        %928 = vmatpush1.bf16.msra.mxu0 0
        %929 = vmatprep.subr.bf16.mxu0 0
        %930 = vmatpush1.bf16.msra.mxu0 0
        %931 = vmatprep.subr.bf16.mxu0 0
        %932 = vmatpush1.bf16.msra.mxu0 0
        %933 = vmatprep.subr.bf16.mxu0 0
        %934 = vmatpush1.bf16.msra.mxu0 0
        %935 = vmatprep.subr.bf16.mxu0 0
        %936 = vmatpush1.bf16.msra.mxu0 0
        %937 = vmatprep.subr.bf16.mxu0 0
        %938 = vmatpush1.bf16.msra.mxu0 0
        %939 = vmatprep.subr.bf16.mxu0 0
        %940 = vmatpush1.bf16.msra.mxu0 0
        %941 = vmatprep.subr.bf16.mxu0 0
        %942 = vmatpush1.bf16.msra.mxu0 0
        %943 = vmatprep.subr.bf16.mxu0 0
        %944 = vmatpush1.bf16.msra.mxu0 0
        %945 = vmatprep.subr.bf16.mxu0 0
        %946 = vmatpush1.bf16.msra.mxu0 0
        %947 = vmatprep.subr.bf16.mxu0 0
        %948 = vmatpush1.bf16.msra.mxu0 0
        %949 = vmatprep.subr.bf16.mxu0 0
        %950 = vmatpush1.bf16.msra.mxu0 0
        %951 = vmatprep.subr.bf16.mxu0 0
        %952 = vmatpush1.bf16.msra.mxu0 0
        %953 = vmatprep.mubr.bf16.mxu0 0
        %954 = vmatmul.mubr.bf16.gmra.mrb[0].mxu0 %v910
        %v955 = vpop.f32.mrb[0].mxu0
        %v956 = vadd.f32 0.0, %v955
        %v957 = vpop.f32.mrb[0].mxu0
        %v958 = vadd.f32 0.0, %v957
        %v959 = vpop.f32.mrb[0].mxu0
        %v960 = vpop.f32.mrb[0].mxu0
        %961 = vdwg.mxu0
        %962 = vmatprep.subr.bf16.mxu0 0
        %963 = vmatpush1.bf16.msra.mxu0 %v919
        %964 = vmatprep.subr.bf16.mxu0 0
        %965 = vmatpush1.bf16.msra.mxu0 0
        %966 = vmatprep.subr.bf16.mxu0 0
        %967 = vmatpush1.bf16.msra.mxu0 0
        %968 = vmatprep.subr.bf16.mxu0 0
        %969 = vmatpush1.bf16.msra.mxu0 0
        %970 = vmatprep.subr.bf16.mxu0 0
        %971 = vmatpush1.bf16.msra.mxu0 0
        %972 = vmatprep.subr.bf16.mxu0 0
        %973 = vmatpush1.bf16.msra.mxu0 0
        %974 = vmatprep.subr.bf16.mxu0 0
        %975 = vmatpush1.bf16.msra.mxu0 0
        %976 = vmatprep.subr.bf16.mxu0 0
        %977 = vmatpush1.bf16.msra.mxu0 0
        %978 = vmatprep.subr.bf16.mxu0 0
        %979 = vmatpush1.bf16.msra.mxu0 0
        %980 = vmatprep.subr.bf16.mxu0 0
        %981 = vmatpush1.bf16.msra.mxu0 0
        %982 = vmatprep.subr.bf16.mxu0 0
        %983 = vmatpush1.bf16.msra.mxu0 0
        %984 = vmatprep.subr.bf16.mxu0 0
        %985 = vmatpush1.bf16.msra.mxu0 0
        %986 = vmatprep.subr.bf16.mxu0 0
        %987 = vmatpush1.bf16.msra.mxu0 0
        %988 = vmatprep.subr.bf16.mxu0 0
        %989 = vmatpush1.bf16.msra.mxu0 0
        %990 = vmatprep.subr.bf16.mxu0 0
        %991 = vmatpush1.bf16.msra.mxu0 0
        %992 = vmatprep.subr.bf16.mxu0 0
        %993 = vmatpush1.bf16.msra.mxu0 0
        %994 = vmatprep.mubr.bf16.mxu0 0
        %995 = vmatmul.mubr.bf16.gmra.mrb[0].mxu0 %v910
        %v996 = vpop.f32.mrb[0].mxu0
        %v997 = vadd.f32 0.0, %v996
        %v998 = vpop.f32.mrb[0].mxu0
        %v999 = vpop.f32.mrb[0].mxu0
        %v1000 = vpop.f32.mrb[0].mxu0
        %1001 = vdwg.mxu0
        %v1002 = vadd.f32 %v891, %v956
        %v1003 = vadd.f32 %v892, %v958
        %v1004 = vadd.f32 %v893, %v997
        %s1005 = scalar_lea.vmem %s2, 14
        %v1006 = vld [vmem:[%s1005] sm:$0x3]
        %1007 = vrot.lane.b32.xlu0 %v259, 87
        %v1008 = vpop.permute.xlu0 %1007
        %1009 = vrot.lane.b32.xlu0 %v260, 87
        %v1010 = vpop.permute.xlu0 %1009
        %1011 = vrot.lane.b32.xlu0 %v261, 87
        %v1012 = vpop.permute.xlu0 %1011
        %1013 = vrot.lane.b32.xlu0 %v262, 87
        %v1014 = vpop.permute.xlu0 %1013
        %vm1015 = vcmask 711680
        %v1016 = vsel %vm1015, %v1008, %v1010
        %v1017 = vsel %vm1015, %v1010, %v1012
        %v1018 = vsel %vm1015, %v1012, %v1014
        %v1020 = vsel %vm278, %v1006, 0
        %v1023 = vsel %vm282, %v1016, 0
        %v1026 = vsel %vm282, %v1017, 0
        %v1029 = vsel %vm282, %v1018, 0
        %1031 = vmatprep.subr.bf16.mxu0 %v1026
        %1032 = vmatpush1.bf16.msra.mxu0 %v1023
        %1033 = vmatprep.subr.bf16.mxu0 0
        %1034 = vmatpush1.bf16.msra.mxu0 0
        %1035 = vmatprep.subr.bf16.mxu0 0
        %1036 = vmatpush1.bf16.msra.mxu0 0
        %1037 = vmatprep.subr.bf16.mxu0 0
        %1038 = vmatpush1.bf16.msra.mxu0 0
        %1039 = vmatprep.subr.bf16.mxu0 0
        %1040 = vmatpush1.bf16.msra.mxu0 0
        %1041 = vmatprep.subr.bf16.mxu0 0
        %1042 = vmatpush1.bf16.msra.mxu0 0
        %1043 = vmatprep.subr.bf16.mxu0 0
        %1044 = vmatpush1.bf16.msra.mxu0 0
        %1045 = vmatprep.subr.bf16.mxu0 0
        %1046 = vmatpush1.bf16.msra.mxu0 0
        %1047 = vmatprep.subr.bf16.mxu0 0
        %1048 = vmatpush1.bf16.msra.mxu0 0
        %1049 = vmatprep.subr.bf16.mxu0 0
        %1050 = vmatpush1.bf16.msra.mxu0 0
        %1051 = vmatprep.subr.bf16.mxu0 0
        %1052 = vmatpush1.bf16.msra.mxu0 0
        %1053 = vmatprep.subr.bf16.mxu0 0
        %1054 = vmatpush1.bf16.msra.mxu0 0
        %1055 = vmatprep.subr.bf16.mxu0 0
        %1056 = vmatpush1.bf16.msra.mxu0 0
        %1057 = vmatprep.subr.bf16.mxu0 0
        %1058 = vmatpush1.bf16.msra.mxu0 0
        %1059 = vmatprep.subr.bf16.mxu0 0
        %1060 = vmatpush1.bf16.msra.mxu0 0
        %1061 = vmatprep.subr.bf16.mxu0 0
        %1062 = vmatpush1.bf16.msra.mxu0 0
        %1063 = vmatprep.mubr.bf16.mxu0 0
        %1064 = vmatmul.mubr.bf16.gmra.mrb[0].mxu0 %v1020
        %v1065 = vpop.f32.mrb[0].mxu0
        %v1066 = vadd.f32 0.0, %v1065
        %v1067 = vpop.f32.mrb[0].mxu0
        %v1068 = vadd.f32 0.0, %v1067
        %v1069 = vpop.f32.mrb[0].mxu0
        %v1070 = vpop.f32.mrb[0].mxu0
        %1071 = vdwg.mxu0
        %1072 = vmatprep.subr.bf16.mxu0 0
        %1073 = vmatpush1.bf16.msra.mxu0 %v1029
        %1074 = vmatprep.subr.bf16.mxu0 0
        %1075 = vmatpush1.bf16.msra.mxu0 0
        %1076 = vmatprep.subr.bf16.mxu0 0
        %1077 = vmatpush1.bf16.msra.mxu0 0
        %1078 = vmatprep.subr.bf16.mxu0 0
        %1079 = vmatpush1.bf16.msra.mxu0 0
        %1080 = vmatprep.subr.bf16.mxu0 0
        %1081 = vmatpush1.bf16.msra.mxu0 0
        %1082 = vmatprep.subr.bf16.mxu0 0
        %1083 = vmatpush1.bf16.msra.mxu0 0
        %1084 = vmatprep.subr.bf16.mxu0 0
        %1085 = vmatpush1.bf16.msra.mxu0 0
        %1086 = vmatprep.subr.bf16.mxu0 0
        %1087 = vmatpush1.bf16.msra.mxu0 0
        %1088 = vmatprep.subr.bf16.mxu0 0
        %1089 = vmatpush1.bf16.msra.mxu0 0
        %1090 = vmatprep.subr.bf16.mxu0 0
        %1091 = vmatpush1.bf16.msra.mxu0 0
        %1092 = vmatprep.subr.bf16.mxu0 0
        %1093 = vmatpush1.bf16.msra.mxu0 0
        %1094 = vmatprep.subr.bf16.mxu0 0
        %1095 = vmatpush1.bf16.msra.mxu0 0
        %1096 = vmatprep.subr.bf16.mxu0 0
        %1097 = vmatpush1.bf16.msra.mxu0 0
        %1098 = vmatprep.subr.bf16.mxu0 0
        %1099 = vmatpush1.bf16.msra.mxu0 0
        %1100 = vmatprep.subr.bf16.mxu0 0
        %1101 = vmatpush1.bf16.msra.mxu0 0
        %1102 = vmatprep.subr.bf16.mxu0 0
        %1103 = vmatpush1.bf16.msra.mxu0 0
        %1104 = vmatprep.mubr.bf16.mxu0 0
        %1105 = vmatmul.mubr.bf16.gmra.mrb[0].mxu0 %v1020
        %v1106 = vpop.f32.mrb[0].mxu0
        %v1107 = vadd.f32 0.0, %v1106
        %v1108 = vpop.f32.mrb[0].mxu0
        %v1109 = vpop.f32.mrb[0].mxu0
        %v1110 = vpop.f32.mrb[0].mxu0
        %1111 = vdwg.mxu0
        %v1112 = vadd.f32 %v1002, %v1066
        %v1113 = vadd.f32 %v1003, %v1068
        %v1114 = vadd.f32 %v1004, %v1107
        %s1115 = scalar_lea.vmem %s2, 16
        %v1116 = vld [vmem:[%s1115] sm:$0x3]
        %1117 = vrot.lane.b32.xlu0 %v259, 86
        %v1118 = vpop.permute.xlu0 %1117
        %1119 = vrot.lane.b32.xlu0 %v260, 86
        %v1120 = vpop.permute.xlu0 %1119
        %1121 = vrot.lane.b32.xlu0 %v261, 86
        %v1122 = vpop.permute.xlu0 %1121
        %1123 = vrot.lane.b32.xlu0 %v262, 86
        %v1124 = vpop.permute.xlu0 %1123
        %vm1125 = vcmask 703488
        %v1126 = vsel %vm1125, %v1118, %v1120
        %v1127 = vsel %vm1125, %v1120, %v1122
        %v1128 = vsel %vm1125, %v1122, %v1124
        %v1130 = vsel %vm278, %v1116, 0
        %v1133 = vsel %vm282, %v1126, 0
        %v1136 = vsel %vm282, %v1127, 0
        %v1139 = vsel %vm282, %v1128, 0
        %1141 = vmatprep.subr.bf16.mxu0 %v1136
        %1142 = vmatpush1.bf16.msra.mxu0 %v1133
        %1143 = vmatprep.subr.bf16.mxu0 0
        %1144 = vmatpush1.bf16.msra.mxu0 0
        %1145 = vmatprep.subr.bf16.mxu0 0
        %1146 = vmatpush1.bf16.msra.mxu0 0
        %1147 = vmatprep.subr.bf16.mxu0 0
        %1148 = vmatpush1.bf16.msra.mxu0 0
        %1149 = vmatprep.subr.bf16.mxu0 0
        %1150 = vmatpush1.bf16.msra.mxu0 0
        %1151 = vmatprep.subr.bf16.mxu0 0
        %1152 = vmatpush1.bf16.msra.mxu0 0
        %1153 = vmatprep.subr.bf16.mxu0 0
        %1154 = vmatpush1.bf16.msra.mxu0 0
        %1155 = vmatprep.subr.bf16.mxu0 0
        %1156 = vmatpush1.bf16.msra.mxu0 0
        %1157 = vmatprep.subr.bf16.mxu0 0
        %1158 = vmatpush1.bf16.msra.mxu0 0
        %1159 = vmatprep.subr.bf16.mxu0 0
        %1160 = vmatpush1.bf16.msra.mxu0 0
        %1161 = vmatprep.subr.bf16.mxu0 0
        %1162 = vmatpush1.bf16.msra.mxu0 0
        %1163 = vmatprep.subr.bf16.mxu0 0
        %1164 = vmatpush1.bf16.msra.mxu0 0
        %1165 = vmatprep.subr.bf16.mxu0 0
        %1166 = vmatpush1.bf16.msra.mxu0 0
        %1167 = vmatprep.subr.bf16.mxu0 0
        %1168 = vmatpush1.bf16.msra.mxu0 0
        %1169 = vmatprep.subr.bf16.mxu0 0
        %1170 = vmatpush1.bf16.msra.mxu0 0
        %1171 = vmatprep.subr.bf16.mxu0 0
        %1172 = vmatpush1.bf16.msra.mxu0 0
        %1173 = vmatprep.mubr.bf16.mxu0 0
        %1174 = vmatmul.mubr.bf16.gmra.mrb[0].mxu0 %v1130
        %v1175 = vpop.f32.mrb[0].mxu0
        %v1176 = vadd.f32 0.0, %v1175
        %v1177 = vpop.f32.mrb[0].mxu0
        %v1178 = vadd.f32 0.0, %v1177
        %v1179 = vpop.f32.mrb[0].mxu0
        %v1180 = vpop.f32.mrb[0].mxu0
        %1181 = vdwg.mxu0
        %1182 = vmatprep.subr.bf16.mxu0 0
        %1183 = vmatpush1.bf16.msra.mxu0 %v1139
        %1184 = vmatprep.subr.bf16.mxu0 0
        %1185 = vmatpush1.bf16.msra.mxu0 0
        %1186 = vmatprep.subr.bf16.mxu0 0
        %1187 = vmatpush1.bf16.msra.mxu0 0
        %1188 = vmatprep.subr.bf16.mxu0 0
        %1189 = vmatpush1.bf16.msra.mxu0 0
        %1190 = vmatprep.subr.bf16.mxu0 0
        %1191 = vmatpush1.bf16.msra.mxu0 0
        %1192 = vmatprep.subr.bf16.mxu0 0
        %1193 = vmatpush1.bf16.msra.mxu0 0
        %1194 = vmatprep.subr.bf16.mxu0 0
        %1195 = vmatpush1.bf16.msra.mxu0 0
        %1196 = vmatprep.subr.bf16.mxu0 0
        %1197 = vmatpush1.bf16.msra.mxu0 0
        %1198 = vmatprep.subr.bf16.mxu0 0
        %1199 = vmatpush1.bf16.msra.mxu0 0
        %1200 = vmatprep.subr.bf16.mxu0 0
        %1201 = vmatpush1.bf16.msra.mxu0 0
        %1202 = vmatprep.subr.bf16.mxu0 0
        %1203 = vmatpush1.bf16.msra.mxu0 0
        %1204 = vmatprep.subr.bf16.mxu0 0
        %1205 = vmatpush1.bf16.msra.mxu0 0
        %1206 = vmatprep.subr.bf16.mxu0 0
        %1207 = vmatpush1.bf16.msra.mxu0 0
        %1208 = vmatprep.subr.bf16.mxu0 0
        %1209 = vmatpush1.bf16.msra.mxu0 0
        %1210 = vmatprep.subr.bf16.mxu0 0
        %1211 = vmatpush1.bf16.msra.mxu0 0
        %1212 = vmatprep.subr.bf16.mxu0 0
        %1213 = vmatpush1.bf16.msra.mxu0 0
        %1214 = vmatprep.mubr.bf16.mxu0 0
        %1215 = vmatmul.mubr.bf16.gmra.mrb[0].mxu0 %v1130
        %v1216 = vpop.f32.mrb[0].mxu0
        %v1217 = vadd.f32 0.0, %v1216
        %v1218 = vpop.f32.mrb[0].mxu0
        %v1219 = vpop.f32.mrb[0].mxu0
        %v1220 = vpop.f32.mrb[0].mxu0
        %1221 = vdwg.mxu0
        %v1222 = vadd.f32 %v1112, %v1176
        %v1223 = vadd.f32 %v1113, %v1178
        %v1224 = vadd.f32 %v1114, %v1217
        %v1225 = vld [vmem:[%s3] sm:$0xf]
        %1227 = vset.pattern.permute.xlu0 0
        %1228 = vperm.xlu0 %1227, %v1225
        %v1229 = vpop.permute.xlu0 %1228
        %v1231 = vadd.f32 %v1222, %v1229
        %v1232 = vadd.f32 %v1223, %v1229
        %v1233 = vadd.f32 %v1224, %v1229
        %v1234 = vsub.f32 0.0, %v1231
        %v1235 = vsub.f32 0.0, %v1232
        %v1236 = vsub.f32 0.0, %v1233
        %v1237 = vmul.f32 %v1234, 1.442695
        %v1238 = vpow.pop %v1237
        %v1239 = vmul.f32 %v1235, 1.442695
        %v1240 = vpow.pop %v1239
        %v1241 = vmul.f32 %v1236, 1.442695
        %v1242 = vpow.pop %v1241
        %v1243 = vadd.f32 %v1238, 1.0
        %v1244 = vadd.f32 %v1240, 1.0
        %v1245 = vadd.f32 %v1242, 1.0
        %v1246 = vrcp.pop %v1243
        %v1247 = vrcp.pop %v1244
        %v1248 = vrcp.pop %v1245
        %v1249 = vmul.f32 %v1231, %v1246
        %v1250 = vmul.f32 %v1232, %v1247
        %v1251 = vmul.f32 %v1233, %v1248
        %v1252 = vld [vmem:[%s1] sm:$0x7]
        %v1254 = vlaneseq
        %v1255 = vshrl.u32 %v1254, 7
        %v1256 = vsub.s32 0, %v1255
        %v1257 = vrot.slane %v1252, %v1256
        %v1258 = vlaneseq
        %v1259 = vshrl.u32 %v1258, 7
        %v1260 = vsub.s32 1, %v1259
        %v1261 = vrot.slane %v1252, %v1260
        %v1262 = vlaneseq
        %v1263 = vshrl.u32 %v1262, 7
        %v1264 = vsub.s32 2, %v1263
        %v1265 = vrot.slane %v1252, %v1264
        %v1269 = vmul.f32 %v1249, %v1257
        %v1270 = vmul.f32 %v1250, %v1261
        %v1271 = vmul.f32 %v1251, %v1265
        %v1272 = vpack.c.bf16 %v1269, %v1269
        %v1273 = vpack.c.bf16 %v1270, %v1270
        %v1274 = vpack.c.bf16 %v1271, %v1271
        %v1275 = vld [vmem:[%s4] sm:$0x3]
        %s1276 = scalar_lea.vmem %s4, 2
        %v1277 = vld [vmem:[%s1276] sm:$0x3]
        %1281 = vrot.lane.b32.xlu0 %v1272, 127
        %v1282 = vpop.permute.xlu0 %1281
        %1283 = vrot.lane.b32.xlu0 %v1273, 127
        %v1284 = vpop.permute.xlu0 %1283
        %1285 = vrot.lane.b32.xlu0 %v1274, 127
        %v1286 = vpop.permute.xlu0 %1285
        %v1287 = vsel %vm275, %v1282, %v1284
        %v1288 = vsel %vm275, %v1284, %v1286
        %v1290 = vsel %vm278, %v1277, 0
        %v1293 = vsel %vm282, %v1287, 0
        %v1296 = vsel %vm282, %v1288, 0
        %v1299 = vsel %vm282, %v1286, 0
        %1301 = vmatprep.subr.bf16.mxu0 %v1296
        %1302 = vmatpush1.bf16.msra.mxu0 %v1293
        %1303 = vmatprep.subr.bf16.mxu0 0
        %1304 = vmatpush1.bf16.msra.mxu0 0
        %1305 = vmatprep.subr.bf16.mxu0 0
        %1306 = vmatpush1.bf16.msra.mxu0 0
        %1307 = vmatprep.subr.bf16.mxu0 0
        %1308 = vmatpush1.bf16.msra.mxu0 0
        %1309 = vmatprep.subr.bf16.mxu0 0
        %1310 = vmatpush1.bf16.msra.mxu0 0
        %1311 = vmatprep.subr.bf16.mxu0 0
        %1312 = vmatpush1.bf16.msra.mxu0 0
        %1313 = vmatprep.subr.bf16.mxu0 0
        %1314 = vmatpush1.bf16.msra.mxu0 0
        %1315 = vmatprep.subr.bf16.mxu0 0
        %1316 = vmatpush1.bf16.msra.mxu0 0
        %1317 = vmatprep.subr.bf16.mxu0 0
        %1318 = vmatpush1.bf16.msra.mxu0 0
        %1319 = vmatprep.subr.bf16.mxu0 0
        %1320 = vmatpush1.bf16.msra.mxu0 0
        %1321 = vmatprep.subr.bf16.mxu0 0
        %1322 = vmatpush1.bf16.msra.mxu0 0
        %1323 = vmatprep.subr.bf16.mxu0 0
        %1324 = vmatpush1.bf16.msra.mxu0 0
        %1325 = vmatprep.subr.bf16.mxu0 0
        %1326 = vmatpush1.bf16.msra.mxu0 0
        %1327 = vmatprep.subr.bf16.mxu0 0
        %1328 = vmatpush1.bf16.msra.mxu0 0
        %1329 = vmatprep.subr.bf16.mxu0 0
        %1330 = vmatpush1.bf16.msra.mxu0 0
        %1331 = vmatprep.subr.bf16.mxu0 0
        %1332 = vmatpush1.bf16.msra.mxu0 0
        %1333 = vmatprep.mubr.bf16.mxu0 0
        %1334 = vmatmul.mubr.bf16.gmra.mrb[0].mxu0 %v1290
        %v1335 = vpop.f32.mrb[0].mxu0
        %v1336 = vadd.f32 0.0, %v1335
        %v1337 = vpop.f32.mrb[0].mxu0
        %v1338 = vadd.f32 0.0, %v1337
        %v1339 = vpop.f32.mrb[0].mxu0
        %v1340 = vpop.f32.mrb[0].mxu0
        %1341 = vdwg.mxu0
        %1342 = vmatprep.subr.bf16.mxu0 0
        %1343 = vmatpush1.bf16.msra.mxu0 %v1299
        %1344 = vmatprep.subr.bf16.mxu0 0
        %1345 = vmatpush1.bf16.msra.mxu0 0
        %1346 = vmatprep.subr.bf16.mxu0 0
        %1347 = vmatpush1.bf16.msra.mxu0 0
        %1348 = vmatprep.subr.bf16.mxu0 0
        %1349 = vmatpush1.bf16.msra.mxu0 0
        %1350 = vmatprep.subr.bf16.mxu0 0
        %1351 = vmatpush1.bf16.msra.mxu0 0
        %1352 = vmatprep.subr.bf16.mxu0 0
        %1353 = vmatpush1.bf16.msra.mxu0 0
        %1354 = vmatprep.subr.bf16.mxu0 0
        %1355 = vmatpush1.bf16.msra.mxu0 0
        %1356 = vmatprep.subr.bf16.mxu0 0
        %1357 = vmatpush1.bf16.msra.mxu0 0
        %1358 = vmatprep.subr.bf16.mxu0 0
        %1359 = vmatpush1.bf16.msra.mxu0 0
        %1360 = vmatprep.subr.bf16.mxu0 0
        %1361 = vmatpush1.bf16.msra.mxu0 0
        %1362 = vmatprep.subr.bf16.mxu0 0
        %1363 = vmatpush1.bf16.msra.mxu0 0
        %1364 = vmatprep.subr.bf16.mxu0 0
        %1365 = vmatpush1.bf16.msra.mxu0 0
        %1366 = vmatprep.subr.bf16.mxu0 0
        %1367 = vmatpush1.bf16.msra.mxu0 0
        %1368 = vmatprep.subr.bf16.mxu0 0
        %1369 = vmatpush1.bf16.msra.mxu0 0
        %1370 = vmatprep.subr.bf16.mxu0 0
        %1371 = vmatpush1.bf16.msra.mxu0 0
        %1372 = vmatprep.subr.bf16.mxu0 0
        %1373 = vmatpush1.bf16.msra.mxu0 0
        %1374 = vmatprep.mubr.bf16.mxu0 0
        %1375 = vmatmul.mubr.bf16.gmra.mrb[0].mxu0 %v1290
        %v1376 = vpop.f32.mrb[0].mxu0
        %v1377 = vadd.f32 0.0, %v1376
        %v1378 = vpop.f32.mrb[0].mxu0
        %v1379 = vpop.f32.mrb[0].mxu0
        %v1380 = vpop.f32.mrb[0].mxu0
        %1381 = vdwg.mxu0
        %v1383 = vsel %vm278, %v1275, 0
        %v1386 = vsel %vm282, %v1272, 0
        %v1389 = vsel %vm282, %v1273, 0
        %v1392 = vsel %vm282, %v1274, 0
        %1394 = vmatprep.subr.bf16.mxu0 %v1389
        %1395 = vmatpush1.bf16.msra.mxu0 %v1386
        %1396 = vmatprep.subr.bf16.mxu0 0
        %1397 = vmatpush1.bf16.msra.mxu0 0
        %1398 = vmatprep.subr.bf16.mxu0 0
        %1399 = vmatpush1.bf16.msra.mxu0 0
        %1400 = vmatprep.subr.bf16.mxu0 0
        %1401 = vmatpush1.bf16.msra.mxu0 0
        %1402 = vmatprep.subr.bf16.mxu0 0
        %1403 = vmatpush1.bf16.msra.mxu0 0
        %1404 = vmatprep.subr.bf16.mxu0 0
        %1405 = vmatpush1.bf16.msra.mxu0 0
        %1406 = vmatprep.subr.bf16.mxu0 0
        %1407 = vmatpush1.bf16.msra.mxu0 0
        %1408 = vmatprep.subr.bf16.mxu0 0
        %1409 = vmatpush1.bf16.msra.mxu0 0
        %1410 = vmatprep.subr.bf16.mxu0 0
        %1411 = vmatpush1.bf16.msra.mxu0 0
        %1412 = vmatprep.subr.bf16.mxu0 0
        %1413 = vmatpush1.bf16.msra.mxu0 0
        %1414 = vmatprep.subr.bf16.mxu0 0
        %1415 = vmatpush1.bf16.msra.mxu0 0
        %1416 = vmatprep.subr.bf16.mxu0 0
        %1417 = vmatpush1.bf16.msra.mxu0 0
        %1418 = vmatprep.subr.bf16.mxu0 0
        %1419 = vmatpush1.bf16.msra.mxu0 0
        %1420 = vmatprep.subr.bf16.mxu0 0
        %1421 = vmatpush1.bf16.msra.mxu0 0
        %1422 = vmatprep.subr.bf16.mxu0 0
        %1423 = vmatpush1.bf16.msra.mxu0 0
        %1424 = vmatprep.subr.bf16.mxu0 0
        %1425 = vmatpush1.bf16.msra.mxu0 0
        %1426 = vmatprep.mubr.bf16.mxu0 0
        %1427 = vmatmul.mubr.bf16.gmra.mrb[0].mxu0 %v1383
        %v1428 = vpop.f32.mrb[0].mxu0
        %v1429 = vadd.f32 %v1336, %v1428
        %v1430 = vpop.f32.mrb[0].mxu0
        %v1431 = vadd.f32 %v1338, %v1430
        %v1432 = vpop.f32.mrb[0].mxu0
        %v1433 = vpop.f32.mrb[0].mxu0
        %1434 = vdwg.mxu0
        %1435 = vmatprep.subr.bf16.mxu0 0
        %1436 = vmatpush1.bf16.msra.mxu0 %v1392
        %1437 = vmatprep.subr.bf16.mxu0 0
        %1438 = vmatpush1.bf16.msra.mxu0 0
        %1439 = vmatprep.subr.bf16.mxu0 0
        %1440 = vmatpush1.bf16.msra.mxu0 0
        %1441 = vmatprep.subr.bf16.mxu0 0
        %1442 = vmatpush1.bf16.msra.mxu0 0
        %1443 = vmatprep.subr.bf16.mxu0 0
        %1444 = vmatpush1.bf16.msra.mxu0 0
        %1445 = vmatprep.subr.bf16.mxu0 0
        %1446 = vmatpush1.bf16.msra.mxu0 0
        %1447 = vmatprep.subr.bf16.mxu0 0
        %1448 = vmatpush1.bf16.msra.mxu0 0
        %1449 = vmatprep.subr.bf16.mxu0 0
        %1450 = vmatpush1.bf16.msra.mxu0 0
        %1451 = vmatprep.subr.bf16.mxu0 0
        %1452 = vmatpush1.bf16.msra.mxu0 0
        %1453 = vmatprep.subr.bf16.mxu0 0
        %1454 = vmatpush1.bf16.msra.mxu0 0
        %1455 = vmatprep.subr.bf16.mxu0 0
        %1456 = vmatpush1.bf16.msra.mxu0 0
        %1457 = vmatprep.subr.bf16.mxu0 0
        %1458 = vmatpush1.bf16.msra.mxu0 0
        %1459 = vmatprep.subr.bf16.mxu0 0
        %1460 = vmatpush1.bf16.msra.mxu0 0
        %1461 = vmatprep.subr.bf16.mxu0 0
        %1462 = vmatpush1.bf16.msra.mxu0 0
        %1463 = vmatprep.subr.bf16.mxu0 0
        %1464 = vmatpush1.bf16.msra.mxu0 0
        %1465 = vmatprep.subr.bf16.mxu0 0
        %1466 = vmatpush1.bf16.msra.mxu0 0
        %1467 = vmatprep.mubr.bf16.mxu0 0
        %1468 = vmatmul.mubr.bf16.gmra.mrb[0].mxu0 %v1383
        %v1469 = vpop.f32.mrb[0].mxu0
        %v1470 = vadd.f32 %v1377, %v1469
        %v1471 = vpop.f32.mrb[0].mxu0
        %v1472 = vpop.f32.mrb[0].mxu0
        %v1473 = vpop.f32.mrb[0].mxu0
        %1474 = vdwg.mxu0
        %s1475 = scalar_lea.vmem %s4, 4
        %v1476 = vld [vmem:[%s1475] sm:$0x3]
        %1477 = vrot.lane.b32.xlu0 %v1272, 126
        %v1478 = vpop.permute.xlu0 %1477
        %1479 = vrot.lane.b32.xlu0 %v1273, 126
        %v1480 = vpop.permute.xlu0 %1479
        %1481 = vrot.lane.b32.xlu0 %v1274, 126
        %v1482 = vpop.permute.xlu0 %1481
        %v1483 = vsel %vm474, %v1478, %v1480
        %v1484 = vsel %vm474, %v1480, %v1482
        %v1486 = vsel %vm278, %v1476, 0
        %v1489 = vsel %vm282, %v1483, 0
        %v1492 = vsel %vm282, %v1484, 0
        %v1495 = vsel %vm282, %v1482, 0
        %1497 = vmatprep.subr.bf16.mxu0 %v1492
        %1498 = vmatpush1.bf16.msra.mxu0 %v1489
        %1499 = vmatprep.subr.bf16.mxu0 0
        %1500 = vmatpush1.bf16.msra.mxu0 0
        %1501 = vmatprep.subr.bf16.mxu0 0
        %1502 = vmatpush1.bf16.msra.mxu0 0
        %1503 = vmatprep.subr.bf16.mxu0 0
        %1504 = vmatpush1.bf16.msra.mxu0 0
        %1505 = vmatprep.subr.bf16.mxu0 0
        %1506 = vmatpush1.bf16.msra.mxu0 0
        %1507 = vmatprep.subr.bf16.mxu0 0
        %1508 = vmatpush1.bf16.msra.mxu0 0
        %1509 = vmatprep.subr.bf16.mxu0 0
        %1510 = vmatpush1.bf16.msra.mxu0 0
        %1511 = vmatprep.subr.bf16.mxu0 0
        %1512 = vmatpush1.bf16.msra.mxu0 0
        %1513 = vmatprep.subr.bf16.mxu0 0
        %1514 = vmatpush1.bf16.msra.mxu0 0
        %1515 = vmatprep.subr.bf16.mxu0 0
        %1516 = vmatpush1.bf16.msra.mxu0 0
        %1517 = vmatprep.subr.bf16.mxu0 0
        %1518 = vmatpush1.bf16.msra.mxu0 0
        %1519 = vmatprep.subr.bf16.mxu0 0
        %1520 = vmatpush1.bf16.msra.mxu0 0
        %1521 = vmatprep.subr.bf16.mxu0 0
        %1522 = vmatpush1.bf16.msra.mxu0 0
        %1523 = vmatprep.subr.bf16.mxu0 0
        %1524 = vmatpush1.bf16.msra.mxu0 0
        %1525 = vmatprep.subr.bf16.mxu0 0
        %1526 = vmatpush1.bf16.msra.mxu0 0
        %1527 = vmatprep.subr.bf16.mxu0 0
        %1528 = vmatpush1.bf16.msra.mxu0 0
        %1529 = vmatprep.mubr.bf16.mxu0 0
        %1530 = vmatmul.mubr.bf16.gmra.mrb[0].mxu0 %v1486
        %v1531 = vpop.f32.mrb[0].mxu0
        %v1532 = vadd.f32 0.0, %v1531
        %v1533 = vpop.f32.mrb[0].mxu0
        %v1534 = vadd.f32 0.0, %v1533
        %v1535 = vpop.f32.mrb[0].mxu0
        %v1536 = vpop.f32.mrb[0].mxu0
        %1537 = vdwg.mxu0
        %1538 = vmatprep.subr.bf16.mxu0 0
        %1539 = vmatpush1.bf16.msra.mxu0 %v1495
        %1540 = vmatprep.subr.bf16.mxu0 0
        %1541 = vmatpush1.bf16.msra.mxu0 0
        %1542 = vmatprep.subr.bf16.mxu0 0
        %1543 = vmatpush1.bf16.msra.mxu0 0
        %1544 = vmatprep.subr.bf16.mxu0 0
        %1545 = vmatpush1.bf16.msra.mxu0 0
        %1546 = vmatprep.subr.bf16.mxu0 0
        %1547 = vmatpush1.bf16.msra.mxu0 0
        %1548 = vmatprep.subr.bf16.mxu0 0
        %1549 = vmatpush1.bf16.msra.mxu0 0
        %1550 = vmatprep.subr.bf16.mxu0 0
        %1551 = vmatpush1.bf16.msra.mxu0 0
        %1552 = vmatprep.subr.bf16.mxu0 0
        %1553 = vmatpush1.bf16.msra.mxu0 0
        %1554 = vmatprep.subr.bf16.mxu0 0
        %1555 = vmatpush1.bf16.msra.mxu0 0
        %1556 = vmatprep.subr.bf16.mxu0 0
        %1557 = vmatpush1.bf16.msra.mxu0 0
        %1558 = vmatprep.subr.bf16.mxu0 0
        %1559 = vmatpush1.bf16.msra.mxu0 0
        %1560 = vmatprep.subr.bf16.mxu0 0
        %1561 = vmatpush1.bf16.msra.mxu0 0
        %1562 = vmatprep.subr.bf16.mxu0 0
        %1563 = vmatpush1.bf16.msra.mxu0 0
        %1564 = vmatprep.subr.bf16.mxu0 0
        %1565 = vmatpush1.bf16.msra.mxu0 0
        %1566 = vmatprep.subr.bf16.mxu0 0
        %1567 = vmatpush1.bf16.msra.mxu0 0
        %1568 = vmatprep.subr.bf16.mxu0 0
        %1569 = vmatpush1.bf16.msra.mxu0 0
        %1570 = vmatprep.mubr.bf16.mxu0 0
        %1571 = vmatmul.mubr.bf16.gmra.mrb[0].mxu0 %v1486
        %v1572 = vpop.f32.mrb[0].mxu0
        %v1573 = vadd.f32 0.0, %v1572
        %v1574 = vpop.f32.mrb[0].mxu0
        %v1575 = vpop.f32.mrb[0].mxu0
        %v1576 = vpop.f32.mrb[0].mxu0
        %1577 = vdwg.mxu0
        %v1578 = vadd.f32 %v1429, %v1532
        %v1579 = vadd.f32 %v1431, %v1534
        %v1580 = vadd.f32 %v1470, %v1573
        %s1581 = scalar_lea.vmem %s4, 6
        %v1582 = vld [vmem:[%s1581] sm:$0x3]
        %1583 = vrot.lane.b32.xlu0 %v1272, 108
        %v1584 = vpop.permute.xlu0 %1583
        %1585 = vrot.lane.b32.xlu0 %v1273, 108
        %v1586 = vpop.permute.xlu0 %1585
        %1587 = vrot.lane.b32.xlu0 %v1274, 108
        %v1588 = vpop.permute.xlu0 %1587
        %v1589 = vsel %vm581, %v1584, %v1586
        %v1590 = vsel %vm581, %v1586, %v1588
        %v1592 = vsel %vm278, %v1582, 0
        %v1595 = vsel %vm282, %v1589, 0
        %v1598 = vsel %vm282, %v1590, 0
        %v1601 = vsel %vm282, %v1588, 0
        %1603 = vmatprep.subr.bf16.mxu0 %v1598
        %1604 = vmatpush1.bf16.msra.mxu0 %v1595
        %1605 = vmatprep.subr.bf16.mxu0 0
        %1606 = vmatpush1.bf16.msra.mxu0 0
        %1607 = vmatprep.subr.bf16.mxu0 0
        %1608 = vmatpush1.bf16.msra.mxu0 0
        %1609 = vmatprep.subr.bf16.mxu0 0
        %1610 = vmatpush1.bf16.msra.mxu0 0
        %1611 = vmatprep.subr.bf16.mxu0 0
        %1612 = vmatpush1.bf16.msra.mxu0 0
        %1613 = vmatprep.subr.bf16.mxu0 0
        %1614 = vmatpush1.bf16.msra.mxu0 0
        %1615 = vmatprep.subr.bf16.mxu0 0
        %1616 = vmatpush1.bf16.msra.mxu0 0
        %1617 = vmatprep.subr.bf16.mxu0 0
        %1618 = vmatpush1.bf16.msra.mxu0 0
        %1619 = vmatprep.subr.bf16.mxu0 0
        %1620 = vmatpush1.bf16.msra.mxu0 0
        %1621 = vmatprep.subr.bf16.mxu0 0
        %1622 = vmatpush1.bf16.msra.mxu0 0
        %1623 = vmatprep.subr.bf16.mxu0 0
        %1624 = vmatpush1.bf16.msra.mxu0 0
        %1625 = vmatprep.subr.bf16.mxu0 0
        %1626 = vmatpush1.bf16.msra.mxu0 0
        %1627 = vmatprep.subr.bf16.mxu0 0
        %1628 = vmatpush1.bf16.msra.mxu0 0
        %1629 = vmatprep.subr.bf16.mxu0 0
        %1630 = vmatpush1.bf16.msra.mxu0 0
        %1631 = vmatprep.subr.bf16.mxu0 0
        %1632 = vmatpush1.bf16.msra.mxu0 0
        %1633 = vmatprep.subr.bf16.mxu0 0
        %1634 = vmatpush1.bf16.msra.mxu0 0
        %1635 = vmatprep.mubr.bf16.mxu0 0
        %1636 = vmatmul.mubr.bf16.gmra.mrb[0].mxu0 %v1592
        %v1637 = vpop.f32.mrb[0].mxu0
        %v1638 = vadd.f32 0.0, %v1637
        %v1639 = vpop.f32.mrb[0].mxu0
        %v1640 = vadd.f32 0.0, %v1639
        %v1641 = vpop.f32.mrb[0].mxu0
        %v1642 = vpop.f32.mrb[0].mxu0
        %1643 = vdwg.mxu0
        %1644 = vmatprep.subr.bf16.mxu0 0
        %1645 = vmatpush1.bf16.msra.mxu0 %v1601
        %1646 = vmatprep.subr.bf16.mxu0 0
        %1647 = vmatpush1.bf16.msra.mxu0 0
        %1648 = vmatprep.subr.bf16.mxu0 0
        %1649 = vmatpush1.bf16.msra.mxu0 0
        %1650 = vmatprep.subr.bf16.mxu0 0
        %1651 = vmatpush1.bf16.msra.mxu0 0
        %1652 = vmatprep.subr.bf16.mxu0 0
        %1653 = vmatpush1.bf16.msra.mxu0 0
        %1654 = vmatprep.subr.bf16.mxu0 0
        %1655 = vmatpush1.bf16.msra.mxu0 0
        %1656 = vmatprep.subr.bf16.mxu0 0
        %1657 = vmatpush1.bf16.msra.mxu0 0
        %1658 = vmatprep.subr.bf16.mxu0 0
        %1659 = vmatpush1.bf16.msra.mxu0 0
        %1660 = vmatprep.subr.bf16.mxu0 0
        %1661 = vmatpush1.bf16.msra.mxu0 0
        %1662 = vmatprep.subr.bf16.mxu0 0
        %1663 = vmatpush1.bf16.msra.mxu0 0
        %1664 = vmatprep.subr.bf16.mxu0 0
        %1665 = vmatpush1.bf16.msra.mxu0 0
        %1666 = vmatprep.subr.bf16.mxu0 0
        %1667 = vmatpush1.bf16.msra.mxu0 0
        %1668 = vmatprep.subr.bf16.mxu0 0
        %1669 = vmatpush1.bf16.msra.mxu0 0
        %1670 = vmatprep.subr.bf16.mxu0 0
        %1671 = vmatpush1.bf16.msra.mxu0 0
        %1672 = vmatprep.subr.bf16.mxu0 0
        %1673 = vmatpush1.bf16.msra.mxu0 0
        %1674 = vmatprep.subr.bf16.mxu0 0
        %1675 = vmatpush1.bf16.msra.mxu0 0
        %1676 = vmatprep.mubr.bf16.mxu0 0
        %1677 = vmatmul.mubr.bf16.gmra.mrb[0].mxu0 %v1592
        %v1678 = vpop.f32.mrb[0].mxu0
        %v1679 = vadd.f32 0.0, %v1678
        %v1680 = vpop.f32.mrb[0].mxu0
        %v1681 = vpop.f32.mrb[0].mxu0
        %v1682 = vpop.f32.mrb[0].mxu0
        %1683 = vdwg.mxu0
        %v1684 = vadd.f32 %v1578, %v1638
        %v1685 = vadd.f32 %v1579, %v1640
        %v1686 = vadd.f32 %v1580, %v1679
        %s1687 = scalar_lea.vmem %s4, 8
        %v1688 = vld [vmem:[%s1687] sm:$0x3]
        %1689 = vrot.lane.b32.xlu0 %v1272, 107
        %v1690 = vpop.permute.xlu0 %1689
        %1691 = vrot.lane.b32.xlu0 %v1273, 107
        %v1692 = vpop.permute.xlu0 %1691
        %1693 = vrot.lane.b32.xlu0 %v1274, 107
        %v1694 = vpop.permute.xlu0 %1693
        %v1695 = vsel %vm688, %v1690, %v1692
        %v1696 = vsel %vm688, %v1692, %v1694
        %v1698 = vsel %vm278, %v1688, 0
        %v1701 = vsel %vm282, %v1695, 0
        %v1704 = vsel %vm282, %v1696, 0
        %v1707 = vsel %vm282, %v1694, 0
        %1709 = vmatprep.subr.bf16.mxu0 %v1704
        %1710 = vmatpush1.bf16.msra.mxu0 %v1701
        %1711 = vmatprep.subr.bf16.mxu0 0
        %1712 = vmatpush1.bf16.msra.mxu0 0
        %1713 = vmatprep.subr.bf16.mxu0 0
        %1714 = vmatpush1.bf16.msra.mxu0 0
        %1715 = vmatprep.subr.bf16.mxu0 0
        %1716 = vmatpush1.bf16.msra.mxu0 0
        %1717 = vmatprep.subr.bf16.mxu0 0
        %1718 = vmatpush1.bf16.msra.mxu0 0
        %1719 = vmatprep.subr.bf16.mxu0 0
        %1720 = vmatpush1.bf16.msra.mxu0 0
        %1721 = vmatprep.subr.bf16.mxu0 0
        %1722 = vmatpush1.bf16.msra.mxu0 0
        %1723 = vmatprep.subr.bf16.mxu0 0
        %1724 = vmatpush1.bf16.msra.mxu0 0
        %1725 = vmatprep.subr.bf16.mxu0 0
        %1726 = vmatpush1.bf16.msra.mxu0 0
        %1727 = vmatprep.subr.bf16.mxu0 0
        %1728 = vmatpush1.bf16.msra.mxu0 0
        %1729 = vmatprep.subr.bf16.mxu0 0
        %1730 = vmatpush1.bf16.msra.mxu0 0
        %1731 = vmatprep.subr.bf16.mxu0 0
        %1732 = vmatpush1.bf16.msra.mxu0 0
        %1733 = vmatprep.subr.bf16.mxu0 0
        %1734 = vmatpush1.bf16.msra.mxu0 0
        %1735 = vmatprep.subr.bf16.mxu0 0
        %1736 = vmatpush1.bf16.msra.mxu0 0
        %1737 = vmatprep.subr.bf16.mxu0 0
        %1738 = vmatpush1.bf16.msra.mxu0 0
        %1739 = vmatprep.subr.bf16.mxu0 0
        %1740 = vmatpush1.bf16.msra.mxu0 0
        %1741 = vmatprep.mubr.bf16.mxu0 0
        %1742 = vmatmul.mubr.bf16.gmra.mrb[0].mxu0 %v1698
        %v1743 = vpop.f32.mrb[0].mxu0
        %v1744 = vadd.f32 0.0, %v1743
        %v1745 = vpop.f32.mrb[0].mxu0
        %v1746 = vadd.f32 0.0, %v1745
        %v1747 = vpop.f32.mrb[0].mxu0
        %v1748 = vpop.f32.mrb[0].mxu0
        %1749 = vdwg.mxu0
        %1750 = vmatprep.subr.bf16.mxu0 0
        %1751 = vmatpush1.bf16.msra.mxu0 %v1707
        %1752 = vmatprep.subr.bf16.mxu0 0
        %1753 = vmatpush1.bf16.msra.mxu0 0
        %1754 = vmatprep.subr.bf16.mxu0 0
        %1755 = vmatpush1.bf16.msra.mxu0 0
        %1756 = vmatprep.subr.bf16.mxu0 0
        %1757 = vmatpush1.bf16.msra.mxu0 0
        %1758 = vmatprep.subr.bf16.mxu0 0
        %1759 = vmatpush1.bf16.msra.mxu0 0
        %1760 = vmatprep.subr.bf16.mxu0 0
        %1761 = vmatpush1.bf16.msra.mxu0 0
        %1762 = vmatprep.subr.bf16.mxu0 0
        %1763 = vmatpush1.bf16.msra.mxu0 0
        %1764 = vmatprep.subr.bf16.mxu0 0
        %1765 = vmatpush1.bf16.msra.mxu0 0
        %1766 = vmatprep.subr.bf16.mxu0 0
        %1767 = vmatpush1.bf16.msra.mxu0 0
        %1768 = vmatprep.subr.bf16.mxu0 0
        %1769 = vmatpush1.bf16.msra.mxu0 0
        %1770 = vmatprep.subr.bf16.mxu0 0
        %1771 = vmatpush1.bf16.msra.mxu0 0
        %1772 = vmatprep.subr.bf16.mxu0 0
        %1773 = vmatpush1.bf16.msra.mxu0 0
        %1774 = vmatprep.subr.bf16.mxu0 0
        %1775 = vmatpush1.bf16.msra.mxu0 0
        %1776 = vmatprep.subr.bf16.mxu0 0
        %1777 = vmatpush1.bf16.msra.mxu0 0
        %1778 = vmatprep.subr.bf16.mxu0 0
        %1779 = vmatpush1.bf16.msra.mxu0 0
        %1780 = vmatprep.subr.bf16.mxu0 0
        %1781 = vmatpush1.bf16.msra.mxu0 0
        %1782 = vmatprep.mubr.bf16.mxu0 0
        %1783 = vmatmul.mubr.bf16.gmra.mrb[0].mxu0 %v1698
        %v1784 = vpop.f32.mrb[0].mxu0
        %v1785 = vadd.f32 0.0, %v1784
        %v1786 = vpop.f32.mrb[0].mxu0
        %v1787 = vpop.f32.mrb[0].mxu0
        %v1788 = vpop.f32.mrb[0].mxu0
        %1789 = vdwg.mxu0
        %v1790 = vadd.f32 %v1684, %v1744
        %v1791 = vadd.f32 %v1685, %v1746
        %v1792 = vadd.f32 %v1686, %v1785
        %s1793 = scalar_lea.vmem %s4, 10
        %v1794 = vld [vmem:[%s1793] sm:$0x3]
        %1795 = vrot.lane.b32.xlu0 %v1272, 106
        %v1796 = vpop.permute.xlu0 %1795
        %1797 = vrot.lane.b32.xlu0 %v1273, 106
        %v1798 = vpop.permute.xlu0 %1797
        %1799 = vrot.lane.b32.xlu0 %v1274, 106
        %v1800 = vpop.permute.xlu0 %1799
        %v1801 = vsel %vm795, %v1796, %v1798
        %v1802 = vsel %vm795, %v1798, %v1800
        %v1804 = vsel %vm278, %v1794, 0
        %v1807 = vsel %vm282, %v1801, 0
        %v1810 = vsel %vm282, %v1802, 0
        %v1813 = vsel %vm282, %v1800, 0
        %1815 = vmatprep.subr.bf16.mxu0 %v1810
        %1816 = vmatpush1.bf16.msra.mxu0 %v1807
        %1817 = vmatprep.subr.bf16.mxu0 0
        %1818 = vmatpush1.bf16.msra.mxu0 0
        %1819 = vmatprep.subr.bf16.mxu0 0
        %1820 = vmatpush1.bf16.msra.mxu0 0
        %1821 = vmatprep.subr.bf16.mxu0 0
        %1822 = vmatpush1.bf16.msra.mxu0 0
        %1823 = vmatprep.subr.bf16.mxu0 0
        %1824 = vmatpush1.bf16.msra.mxu0 0
        %1825 = vmatprep.subr.bf16.mxu0 0
        %1826 = vmatpush1.bf16.msra.mxu0 0
        %1827 = vmatprep.subr.bf16.mxu0 0
        %1828 = vmatpush1.bf16.msra.mxu0 0
        %1829 = vmatprep.subr.bf16.mxu0 0
        %1830 = vmatpush1.bf16.msra.mxu0 0
        %1831 = vmatprep.subr.bf16.mxu0 0
        %1832 = vmatpush1.bf16.msra.mxu0 0
        %1833 = vmatprep.subr.bf16.mxu0 0
        %1834 = vmatpush1.bf16.msra.mxu0 0
        %1835 = vmatprep.subr.bf16.mxu0 0
        %1836 = vmatpush1.bf16.msra.mxu0 0
        %1837 = vmatprep.subr.bf16.mxu0 0
        %1838 = vmatpush1.bf16.msra.mxu0 0
        %1839 = vmatprep.subr.bf16.mxu0 0
        %1840 = vmatpush1.bf16.msra.mxu0 0
        %1841 = vmatprep.subr.bf16.mxu0 0
        %1842 = vmatpush1.bf16.msra.mxu0 0
        %1843 = vmatprep.subr.bf16.mxu0 0
        %1844 = vmatpush1.bf16.msra.mxu0 0
        %1845 = vmatprep.subr.bf16.mxu0 0
        %1846 = vmatpush1.bf16.msra.mxu0 0
        %1847 = vmatprep.mubr.bf16.mxu0 0
        %1848 = vmatmul.mubr.bf16.gmra.mrb[0].mxu0 %v1804
        %v1849 = vpop.f32.mrb[0].mxu0
        %v1850 = vadd.f32 0.0, %v1849
        %v1851 = vpop.f32.mrb[0].mxu0
        %v1852 = vadd.f32 0.0, %v1851
        %v1853 = vpop.f32.mrb[0].mxu0
        %v1854 = vpop.f32.mrb[0].mxu0
        %1855 = vdwg.mxu0
        %1856 = vmatprep.subr.bf16.mxu0 0
        %1857 = vmatpush1.bf16.msra.mxu0 %v1813
        %1858 = vmatprep.subr.bf16.mxu0 0
        %1859 = vmatpush1.bf16.msra.mxu0 0
        %1860 = vmatprep.subr.bf16.mxu0 0
        %1861 = vmatpush1.bf16.msra.mxu0 0
        %1862 = vmatprep.subr.bf16.mxu0 0
        %1863 = vmatpush1.bf16.msra.mxu0 0
        %1864 = vmatprep.subr.bf16.mxu0 0
        %1865 = vmatpush1.bf16.msra.mxu0 0
        %1866 = vmatprep.subr.bf16.mxu0 0
        %1867 = vmatpush1.bf16.msra.mxu0 0
        %1868 = vmatprep.subr.bf16.mxu0 0
        %1869 = vmatpush1.bf16.msra.mxu0 0
        %1870 = vmatprep.subr.bf16.mxu0 0
        %1871 = vmatpush1.bf16.msra.mxu0 0
        %1872 = vmatprep.subr.bf16.mxu0 0
        %1873 = vmatpush1.bf16.msra.mxu0 0
        %1874 = vmatprep.subr.bf16.mxu0 0
        %1875 = vmatpush1.bf16.msra.mxu0 0
        %1876 = vmatprep.subr.bf16.mxu0 0
        %1877 = vmatpush1.bf16.msra.mxu0 0
        %1878 = vmatprep.subr.bf16.mxu0 0
        %1879 = vmatpush1.bf16.msra.mxu0 0
        %1880 = vmatprep.subr.bf16.mxu0 0
        %1881 = vmatpush1.bf16.msra.mxu0 0
        %1882 = vmatprep.subr.bf16.mxu0 0
        %1883 = vmatpush1.bf16.msra.mxu0 0
        %1884 = vmatprep.subr.bf16.mxu0 0
        %1885 = vmatpush1.bf16.msra.mxu0 0
        %1886 = vmatprep.subr.bf16.mxu0 0
        %1887 = vmatpush1.bf16.msra.mxu0 0
        %1888 = vmatprep.mubr.bf16.mxu0 0
        %1889 = vmatmul.mubr.bf16.gmra.mrb[0].mxu0 %v1804
        %v1890 = vpop.f32.mrb[0].mxu0
        %v1891 = vadd.f32 0.0, %v1890
        %v1892 = vpop.f32.mrb[0].mxu0
        %v1893 = vpop.f32.mrb[0].mxu0
        %v1894 = vpop.f32.mrb[0].mxu0
        %1895 = vdwg.mxu0
        %v1896 = vadd.f32 %v1790, %v1850
        %v1897 = vadd.f32 %v1791, %v1852
        %v1898 = vadd.f32 %v1792, %v1891
        %s1899 = scalar_lea.vmem %s4, 12
        %v1900 = vld [vmem:[%s1899] sm:$0x3]
        %1901 = vrot.lane.b32.xlu0 %v1272, 88
        %v1902 = vpop.permute.xlu0 %1901
        %1903 = vrot.lane.b32.xlu0 %v1273, 88
        %v1904 = vpop.permute.xlu0 %1903
        %1905 = vrot.lane.b32.xlu0 %v1274, 88
        %v1906 = vpop.permute.xlu0 %1905
        %v1907 = vsel %vm905, %v1902, %v1904
        %v1908 = vsel %vm905, %v1904, %v1906
        %v1910 = vsel %vm278, %v1900, 0
        %v1913 = vsel %vm282, %v1907, 0
        %v1916 = vsel %vm282, %v1908, 0
        %v1919 = vsel %vm282, %v1906, 0
        %1921 = vmatprep.subr.bf16.mxu0 %v1916
        %1922 = vmatpush1.bf16.msra.mxu0 %v1913
        %1923 = vmatprep.subr.bf16.mxu0 0
        %1924 = vmatpush1.bf16.msra.mxu0 0
        %1925 = vmatprep.subr.bf16.mxu0 0
        %1926 = vmatpush1.bf16.msra.mxu0 0
        %1927 = vmatprep.subr.bf16.mxu0 0
        %1928 = vmatpush1.bf16.msra.mxu0 0
        %1929 = vmatprep.subr.bf16.mxu0 0
        %1930 = vmatpush1.bf16.msra.mxu0 0
        %1931 = vmatprep.subr.bf16.mxu0 0
        %1932 = vmatpush1.bf16.msra.mxu0 0
        %1933 = vmatprep.subr.bf16.mxu0 0
        %1934 = vmatpush1.bf16.msra.mxu0 0
        %1935 = vmatprep.subr.bf16.mxu0 0
        %1936 = vmatpush1.bf16.msra.mxu0 0
        %1937 = vmatprep.subr.bf16.mxu0 0
        %1938 = vmatpush1.bf16.msra.mxu0 0
        %1939 = vmatprep.subr.bf16.mxu0 0
        %1940 = vmatpush1.bf16.msra.mxu0 0
        %1941 = vmatprep.subr.bf16.mxu0 0
        %1942 = vmatpush1.bf16.msra.mxu0 0
        %1943 = vmatprep.subr.bf16.mxu0 0
        %1944 = vmatpush1.bf16.msra.mxu0 0
        %1945 = vmatprep.subr.bf16.mxu0 0
        %1946 = vmatpush1.bf16.msra.mxu0 0
        %1947 = vmatprep.subr.bf16.mxu0 0
        %1948 = vmatpush1.bf16.msra.mxu0 0
        %1949 = vmatprep.subr.bf16.mxu0 0
        %1950 = vmatpush1.bf16.msra.mxu0 0
        %1951 = vmatprep.subr.bf16.mxu0 0
        %1952 = vmatpush1.bf16.msra.mxu0 0
        %1953 = vmatprep.mubr.bf16.mxu0 0
        %1954 = vmatmul.mubr.bf16.gmra.mrb[0].mxu0 %v1910
        %v1955 = vpop.f32.mrb[0].mxu0
        %v1956 = vadd.f32 0.0, %v1955
        %v1957 = vpop.f32.mrb[0].mxu0
        %v1958 = vadd.f32 0.0, %v1957
        %v1959 = vpop.f32.mrb[0].mxu0
        %v1960 = vpop.f32.mrb[0].mxu0
        %1961 = vdwg.mxu0
        %1962 = vmatprep.subr.bf16.mxu0 0
        %1963 = vmatpush1.bf16.msra.mxu0 %v1919
        %1964 = vmatprep.subr.bf16.mxu0 0
        %1965 = vmatpush1.bf16.msra.mxu0 0
        %1966 = vmatprep.subr.bf16.mxu0 0
        %1967 = vmatpush1.bf16.msra.mxu0 0
        %1968 = vmatprep.subr.bf16.mxu0 0
        %1969 = vmatpush1.bf16.msra.mxu0 0
        %1970 = vmatprep.subr.bf16.mxu0 0
        %1971 = vmatpush1.bf16.msra.mxu0 0
        %1972 = vmatprep.subr.bf16.mxu0 0
        %1973 = vmatpush1.bf16.msra.mxu0 0
        %1974 = vmatprep.subr.bf16.mxu0 0
        %1975 = vmatpush1.bf16.msra.mxu0 0
        %1976 = vmatprep.subr.bf16.mxu0 0
        %1977 = vmatpush1.bf16.msra.mxu0 0
        %1978 = vmatprep.subr.bf16.mxu0 0
        %1979 = vmatpush1.bf16.msra.mxu0 0
        %1980 = vmatprep.subr.bf16.mxu0 0
        %1981 = vmatpush1.bf16.msra.mxu0 0
        %1982 = vmatprep.subr.bf16.mxu0 0
        %1983 = vmatpush1.bf16.msra.mxu0 0
        %1984 = vmatprep.subr.bf16.mxu0 0
        %1985 = vmatpush1.bf16.msra.mxu0 0
        %1986 = vmatprep.subr.bf16.mxu0 0
        %1987 = vmatpush1.bf16.msra.mxu0 0
        %1988 = vmatprep.subr.bf16.mxu0 0
        %1989 = vmatpush1.bf16.msra.mxu0 0
        %1990 = vmatprep.subr.bf16.mxu0 0
        %1991 = vmatpush1.bf16.msra.mxu0 0
        %1992 = vmatprep.subr.bf16.mxu0 0
        %1993 = vmatpush1.bf16.msra.mxu0 0
        %1994 = vmatprep.mubr.bf16.mxu0 0
        %1995 = vmatmul.mubr.bf16.gmra.mrb[0].mxu0 %v1910
        %v1996 = vpop.f32.mrb[0].mxu0
        %v1997 = vadd.f32 0.0, %v1996
        %v1998 = vpop.f32.mrb[0].mxu0
        %v1999 = vpop.f32.mrb[0].mxu0
        %v2000 = vpop.f32.mrb[0].mxu0
        %2001 = vdwg.mxu0
        %v2002 = vadd.f32 %v1896, %v1956
        %v2003 = vadd.f32 %v1897, %v1958
        %v2004 = vadd.f32 %v1898, %v1997
        %s2005 = scalar_lea.vmem %s4, 14
        %v2006 = vld [vmem:[%s2005] sm:$0x3]
        %2007 = vrot.lane.b32.xlu0 %v1272, 87
        %v2008 = vpop.permute.xlu0 %2007
        %2009 = vrot.lane.b32.xlu0 %v1273, 87
        %v2010 = vpop.permute.xlu0 %2009
        %2011 = vrot.lane.b32.xlu0 %v1274, 87
        %v2012 = vpop.permute.xlu0 %2011
        %v2013 = vsel %vm1015, %v2008, %v2010
        %v2014 = vsel %vm1015, %v2010, %v2012
        %v2016 = vsel %vm278, %v2006, 0
        %v2019 = vsel %vm282, %v2013, 0
        %v2022 = vsel %vm282, %v2014, 0
        %v2025 = vsel %vm282, %v2012, 0
        %2027 = vmatprep.subr.bf16.mxu0 %v2022
        %2028 = vmatpush1.bf16.msra.mxu0 %v2019
        %2029 = vmatprep.subr.bf16.mxu0 0
        %2030 = vmatpush1.bf16.msra.mxu0 0
        %2031 = vmatprep.subr.bf16.mxu0 0
        %2032 = vmatpush1.bf16.msra.mxu0 0
        %2033 = vmatprep.subr.bf16.mxu0 0
        %2034 = vmatpush1.bf16.msra.mxu0 0
        %2035 = vmatprep.subr.bf16.mxu0 0
        %2036 = vmatpush1.bf16.msra.mxu0 0
        %2037 = vmatprep.subr.bf16.mxu0 0
        %2038 = vmatpush1.bf16.msra.mxu0 0
        %2039 = vmatprep.subr.bf16.mxu0 0
        %2040 = vmatpush1.bf16.msra.mxu0 0
        %2041 = vmatprep.subr.bf16.mxu0 0
        %2042 = vmatpush1.bf16.msra.mxu0 0
        %2043 = vmatprep.subr.bf16.mxu0 0
        %2044 = vmatpush1.bf16.msra.mxu0 0
        %2045 = vmatprep.subr.bf16.mxu0 0
        %2046 = vmatpush1.bf16.msra.mxu0 0
        %2047 = vmatprep.subr.bf16.mxu0 0
        %2048 = vmatpush1.bf16.msra.mxu0 0
        %2049 = vmatprep.subr.bf16.mxu0 0
        %2050 = vmatpush1.bf16.msra.mxu0 0
        %2051 = vmatprep.subr.bf16.mxu0 0
        %2052 = vmatpush1.bf16.msra.mxu0 0
        %2053 = vmatprep.subr.bf16.mxu0 0
        %2054 = vmatpush1.bf16.msra.mxu0 0
        %2055 = vmatprep.subr.bf16.mxu0 0
        %2056 = vmatpush1.bf16.msra.mxu0 0
        %2057 = vmatprep.subr.bf16.mxu0 0
        %2058 = vmatpush1.bf16.msra.mxu0 0
        %2059 = vmatprep.mubr.bf16.mxu0 0
        %2060 = vmatmul.mubr.bf16.gmra.mrb[0].mxu0 %v2016
        %v2061 = vpop.f32.mrb[0].mxu0
        %v2062 = vadd.f32 0.0, %v2061
        %v2063 = vpop.f32.mrb[0].mxu0
        %v2064 = vadd.f32 0.0, %v2063
        %v2065 = vpop.f32.mrb[0].mxu0
        %v2066 = vpop.f32.mrb[0].mxu0
        %2067 = vdwg.mxu0
        %2068 = vmatprep.subr.bf16.mxu0 0
        %2069 = vmatpush1.bf16.msra.mxu0 %v2025
        %2070 = vmatprep.subr.bf16.mxu0 0
        %2071 = vmatpush1.bf16.msra.mxu0 0
        %2072 = vmatprep.subr.bf16.mxu0 0
        %2073 = vmatpush1.bf16.msra.mxu0 0
        %2074 = vmatprep.subr.bf16.mxu0 0
        %2075 = vmatpush1.bf16.msra.mxu0 0
        %2076 = vmatprep.subr.bf16.mxu0 0
        %2077 = vmatpush1.bf16.msra.mxu0 0
        %2078 = vmatprep.subr.bf16.mxu0 0
        %2079 = vmatpush1.bf16.msra.mxu0 0
        %2080 = vmatprep.subr.bf16.mxu0 0
        %2081 = vmatpush1.bf16.msra.mxu0 0
        %2082 = vmatprep.subr.bf16.mxu0 0
        %2083 = vmatpush1.bf16.msra.mxu0 0
        %2084 = vmatprep.subr.bf16.mxu0 0
        %2085 = vmatpush1.bf16.msra.mxu0 0
        %2086 = vmatprep.subr.bf16.mxu0 0
        %2087 = vmatpush1.bf16.msra.mxu0 0
        %2088 = vmatprep.subr.bf16.mxu0 0
        %2089 = vmatpush1.bf16.msra.mxu0 0
        %2090 = vmatprep.subr.bf16.mxu0 0
        %2091 = vmatpush1.bf16.msra.mxu0 0
        %2092 = vmatprep.subr.bf16.mxu0 0
        %2093 = vmatpush1.bf16.msra.mxu0 0
        %2094 = vmatprep.subr.bf16.mxu0 0
        %2095 = vmatpush1.bf16.msra.mxu0 0
        %2096 = vmatprep.subr.bf16.mxu0 0
        %2097 = vmatpush1.bf16.msra.mxu0 0
        %2098 = vmatprep.subr.bf16.mxu0 0
        %2099 = vmatpush1.bf16.msra.mxu0 0
        %2100 = vmatprep.mubr.bf16.mxu0 0
        %2101 = vmatmul.mubr.bf16.gmra.mrb[0].mxu0 %v2016
        %v2102 = vpop.f32.mrb[0].mxu0
        %v2103 = vadd.f32 0.0, %v2102
        %v2104 = vpop.f32.mrb[0].mxu0
        %v2105 = vpop.f32.mrb[0].mxu0
        %v2106 = vpop.f32.mrb[0].mxu0
        %2107 = vdwg.mxu0
        %v2108 = vadd.f32 %v2002, %v2062
        %v2109 = vadd.f32 %v2003, %v2064
        %v2110 = vadd.f32 %v2004, %v2103
        %s2111 = scalar_lea.vmem %s4, 16
        %v2112 = vld [vmem:[%s2111] sm:$0x3]
        %2113 = vrot.lane.b32.xlu0 %v1272, 86
        %v2114 = vpop.permute.xlu0 %2113
        %2115 = vrot.lane.b32.xlu0 %v1273, 86
        %v2116 = vpop.permute.xlu0 %2115
        %2117 = vrot.lane.b32.xlu0 %v1274, 86
        %v2118 = vpop.permute.xlu0 %2117
        %v2119 = vsel %vm1125, %v2114, %v2116
        %v2120 = vsel %vm1125, %v2116, %v2118
        %v2122 = vsel %vm278, %v2112, 0
        %v2125 = vsel %vm282, %v2119, 0
        %v2128 = vsel %vm282, %v2120, 0
        %v2131 = vsel %vm282, %v2118, 0
        %2133 = vmatprep.subr.bf16.mxu0 %v2128
        %2134 = vmatpush1.bf16.msra.mxu0 %v2125
        %2135 = vmatprep.subr.bf16.mxu0 0
        %2136 = vmatpush1.bf16.msra.mxu0 0
        %2137 = vmatprep.subr.bf16.mxu0 0
        %2138 = vmatpush1.bf16.msra.mxu0 0
        %2139 = vmatprep.subr.bf16.mxu0 0
        %2140 = vmatpush1.bf16.msra.mxu0 0
        %2141 = vmatprep.subr.bf16.mxu0 0
        %2142 = vmatpush1.bf16.msra.mxu0 0
        %2143 = vmatprep.subr.bf16.mxu0 0
        %2144 = vmatpush1.bf16.msra.mxu0 0
        %2145 = vmatprep.subr.bf16.mxu0 0
        %2146 = vmatpush1.bf16.msra.mxu0 0
        %2147 = vmatprep.subr.bf16.mxu0 0
        %2148 = vmatpush1.bf16.msra.mxu0 0
        %2149 = vmatprep.subr.bf16.mxu0 0
        %2150 = vmatpush1.bf16.msra.mxu0 0
        %2151 = vmatprep.subr.bf16.mxu0 0
        %2152 = vmatpush1.bf16.msra.mxu0 0
        %2153 = vmatprep.subr.bf16.mxu0 0
        %2154 = vmatpush1.bf16.msra.mxu0 0
        %2155 = vmatprep.subr.bf16.mxu0 0
        %2156 = vmatpush1.bf16.msra.mxu0 0
        %2157 = vmatprep.subr.bf16.mxu0 0
        %2158 = vmatpush1.bf16.msra.mxu0 0
        %2159 = vmatprep.subr.bf16.mxu0 0
        %2160 = vmatpush1.bf16.msra.mxu0 0
        %2161 = vmatprep.subr.bf16.mxu0 0
        %2162 = vmatpush1.bf16.msra.mxu0 0
        %2163 = vmatprep.subr.bf16.mxu0 0
        %2164 = vmatpush1.bf16.msra.mxu0 0
        %2165 = vmatprep.mubr.bf16.mxu0 0
        %2166 = vmatmul.mubr.bf16.gmra.mrb[0].mxu0 %v2122
        %v2167 = vpop.f32.mrb[0].mxu0
        %v2168 = vadd.f32 0.0, %v2167
        %v2169 = vpop.f32.mrb[0].mxu0
        %v2170 = vadd.f32 0.0, %v2169
        %v2171 = vpop.f32.mrb[0].mxu0
        %v2172 = vpop.f32.mrb[0].mxu0
        %2173 = vdwg.mxu0
        %2174 = vmatprep.subr.bf16.mxu0 0
        %2175 = vmatpush1.bf16.msra.mxu0 %v2131
        %2176 = vmatprep.subr.bf16.mxu0 0
        %2177 = vmatpush1.bf16.msra.mxu0 0
        %2178 = vmatprep.subr.bf16.mxu0 0
        %2179 = vmatpush1.bf16.msra.mxu0 0
        %2180 = vmatprep.subr.bf16.mxu0 0
        %2181 = vmatpush1.bf16.msra.mxu0 0
        %2182 = vmatprep.subr.bf16.mxu0 0
        %2183 = vmatpush1.bf16.msra.mxu0 0
        %2184 = vmatprep.subr.bf16.mxu0 0
        %2185 = vmatpush1.bf16.msra.mxu0 0
        %2186 = vmatprep.subr.bf16.mxu0 0
        %2187 = vmatpush1.bf16.msra.mxu0 0
        %2188 = vmatprep.subr.bf16.mxu0 0
        %2189 = vmatpush1.bf16.msra.mxu0 0
        %2190 = vmatprep.subr.bf16.mxu0 0
        %2191 = vmatpush1.bf16.msra.mxu0 0
        %2192 = vmatprep.subr.bf16.mxu0 0
        %2193 = vmatpush1.bf16.msra.mxu0 0
        %2194 = vmatprep.subr.bf16.mxu0 0
        %2195 = vmatpush1.bf16.msra.mxu0 0
        %2196 = vmatprep.subr.bf16.mxu0 0
        %2197 = vmatpush1.bf16.msra.mxu0 0
        %2198 = vmatprep.subr.bf16.mxu0 0
        %2199 = vmatpush1.bf16.msra.mxu0 0
        %2200 = vmatprep.subr.bf16.mxu0 0
        %2201 = vmatpush1.bf16.msra.mxu0 0
        %2202 = vmatprep.subr.bf16.mxu0 0
        %2203 = vmatpush1.bf16.msra.mxu0 0
        %2204 = vmatprep.subr.bf16.mxu0 0
        %2205 = vmatpush1.bf16.msra.mxu0 0
        %2206 = vmatprep.mubr.bf16.mxu0 0
        %2207 = vmatmul.mubr.bf16.gmra.mrb[0].mxu0 %v2122
        %v2208 = vpop.f32.mrb[0].mxu0
        %v2209 = vadd.f32 0.0, %v2208
        %v2210 = vpop.f32.mrb[0].mxu0
        %v2211 = vpop.f32.mrb[0].mxu0
        %v2212 = vpop.f32.mrb[0].mxu0
        %2213 = vdwg.mxu0
        %v2214 = vadd.f32 %v2108, %v2168
        %v2215 = vadd.f32 %v2109, %v2170
        %v2216 = vadd.f32 %v2110, %v2209
        %v2217 = vld [vmem:[%s5] sm:$0xf]
        %2219 = vset.pattern.permute.xlu0 0
        %2220 = vperm.xlu0 %2219, %v2217
        %v2221 = vpop.permute.xlu0 %2220
        %v2223 = vadd.f32 %v2214, %v2221
        %v2224 = vadd.f32 %v2215, %v2221
        %v2225 = vadd.f32 %v2216, %v2221
        %v2226 = vsub.f32 0.0, %v2223
        %v2227 = vsub.f32 0.0, %v2224
        %v2228 = vsub.f32 0.0, %v2225
        %v2229 = vmul.f32 %v2226, 1.442695
        %v2230 = vpow.pop %v2229
        %v2231 = vmul.f32 %v2227, 1.442695
        %v2232 = vpow.pop %v2231
        %v2233 = vmul.f32 %v2228, 1.442695
        %v2234 = vpow.pop %v2233
        %v2235 = vadd.f32 %v2230, 1.0
        %v2236 = vadd.f32 %v2232, 1.0
        %v2237 = vadd.f32 %v2234, 1.0
        %v2238 = vrcp.pop %v2235
        %v2239 = vrcp.pop %v2236
        %v2240 = vrcp.pop %v2237
        %v2241 = vmul.f32 %v2223, %v2238
        %v2242 = vmul.f32 %v2224, %v2239
        %v2243 = vmul.f32 %v2225, %v2240
        %v2247 = vcombine.low %v2241, %v2242
        %2248 = vrot.lane.b32.xlu0 %v2247, 42
        %v2249 = vpop.permute.xlu0 %2248
        %2250 = vrot.lane.b32.xlu0 %v2243, 42
        %v2251 = vpop.permute.xlu0 %2250
        %v2252 = vrot.slane %v2249, 4
        %vm2253 = vcmask 343040
        %v2254 = vsel %vm2253, %v2252, %v2249
        %v2255 = vsel %vm2253, %v2252, %v2251
        %v2258 = vadd.f32 %v251, %v2254
        %v2259 = vadd.f32 %v252, %v2255
        %2262 = vrot.lane.b32.xlu0 %v2258, 86
        %v2263 = vpop.permute.xlu0 %2262
        %2264 = vrot.lane.b32.xlu0 %v2259, 86
        %v2265 = vpop.permute.xlu0 %2264
        %v2266 = vrot.slane %v2263, 4
        %v2267 = vrot.slane %v2265, 4
        %vm2268 = vcmask 1043456
        %v2269 = vsel %vm2268, %v2266, %v2267
        %vm2270 = vcmask 703488
        %v2271 = vsel %vm2270, %v2263, %v2269
        %2274 = vst [vmem:[%s244] sm:$0xff] %v2271
        %vm2275 = vcmask 519168
        %2276 = vst.msk [vmem:[%s244 + $0x8] sm:$0xf] %vm2275, %v2265
        %s2277 = sand.u32 %s159, 1
        %s2278 = scalar_lea.sflag [#allocation3], %s2277
        %s2279 = sand.u32 %s159, 1
        %s2280 = smul.addr %s2279, 12
        %s2281 = scalar_lea.vmem [#allocation2], %s2280
        // Predicated region
        $region45: #{tpu_custom_call.1} parent=43 // pred_check
          %p2282 = pneg %p169
        $region46: #{tpu_custom_call.1} parent=43 // pred_check_branch
          %2284 = sbr.rel (%p2282) target = $region48
        $region47: #{tpu_custom_call.1} parent=43 // pred_region
          %s2286 = ssub.s32 192, 192
          %2287 = vsyncadd %s2278, %s2286
          %s2288 = smul.addr %s20, 3
          %s2289 = smul.addr %s2288, 64
          %s2290 = scalar_lea.hbm %s6, %s2289
          %s2292 = sshll.u32 %s2281, 4
          %s2293 = int_to_ptr.vmem [resolvable:$true] %s2292
          %2295 = dma.vmem_to_hbm [thread:$0]  %s2293, 192, %s2290, %s2278
        $region48: #{tpu_custom_call.1} parent=43 // pred_fallthru
          _
      $region44: #{tpu_custom_call.1} parent=5 // pred_fallthru
        _
      %p2296 = scmp.le.s32.totalorder 2, %s15
      // Predicated region
      $region49: #{tpu_custom_call.1} parent=5 // pred_check
        %p2297 = pneg %p2296
      $region50: #{tpu_custom_call.1} parent=5 // pred_check_branch
        %2299 = sbr.rel (%p2297) target = $region52
      $region51: #{tpu_custom_call.1} parent=5 // pred_region
        %s2300 = ssub.s32 %s15, 2
        // Predicated region
        $region53: #{tpu_custom_call.1} parent=51 // pred_check
          %p2301 = pneg %p175
        $region54: #{tpu_custom_call.1} parent=51 // pred_check_branch
          %2303 = sbr.rel (%p2301) target = $region56
        $region55: #{tpu_custom_call.1} parent=51 // pred_region
          %s2304 = sand.u32 %s160, 1
          %s2305 = scalar_lea.sflag [#allocation3], %s2304
          %s2306 = sand.u32 %s160, 1
          %s2307 = smul.addr %s2306, 12
          %s2308 = scalar_lea.vmem [#allocation2], %s2307
          %2309 = dma.done %s2305, 192
        $region56: #{tpu_custom_call.1} parent=51 // pred_fallthru
          _
      $region52: #{tpu_custom_call.1} parent=5 // pred_fallthru
        _
    $region6: #{tpu_custom_call.1} parent=1 // loop_footer
      %s19 = sadd.s32 1, %s15
    $region7: #{tpu_custom_call.1} parent=1 // loop_footer_branch
      %14 = sbr.rel target = $region3
    $region8: #{tpu_custom_call.1} parent=1 // loop_exit
      _
    %2310 = vsyncpa [#allocation3], 1
    %s2311 = scalar_lea.sflag [#allocation3], 1
    %2312 = vsyncpa %s2311, 1

</llo_original>
